<compile_context>
chip_gen: v5e
topology: v5e:2x2
jax: 0.10.0
libtpu: 0.0.40
codegen_flags: <defaults>
</compile_context>

<pallas_src>
import functools
import math

import jax
import jax.numpy as jnp
from jax.experimental import pallas as pl

# ---- small synthetic BERT config (no checkpoint is loaded) ------------------
VOCAB = 100
MAX_POS = 64
HIDDEN = 32
NUM_HEADS = 4
HEAD_DIM = HIDDEN // NUM_HEADS
INTERMEDIATE = 64
NUM_LAYERS = 2
NUM_CLASSES = 5
LN_EPS = 1e-12          # HuggingFace BERT default layer_norm_eps

# ---- lane-dense padded dims (128-lane vreg width) ---------------------------
HP = 128                # padded hidden
CP = 128                # padded NUM_CLASSES (= 5 real)
VROWS = 16              # sublane-padded rows of the per-layer packed vectors

# row indices inside the packed per-layer vector block (L, VROWS, 128)
(R_BQ, R_BK, R_BV, R_BO, R_G1, R_B1, R_BI, R_BO2, R_G2, R_B2) = range(10)
# row indices inside the packed const vector block (8, 128)
(C_EMB_G, C_EMB_B, C_CLS_B) = range(3)

NEG_BIAS = -1e30        # additive score bias for cross-sequence positions


# -----------------------------------------------------------------------------
# Fused kernel: emb-LayerNorm -> NUM_LAYERS encoder layers -> classifier.
# No grid: everything (weights + activations) is VMEM resident; the layer loop
# is statically unrolled so the scheduler sees the whole thing at once.
# -----------------------------------------------------------------------------
def bert_fused_kernel(emb_ref, cvec_ref, bias_ref,
                      wq_ref, wk_ref, wv_ref, wo_ref, wi_ref, wo2_ref,
                      vecs_ref, wcls_ref, logits_ref, *, batch, seq):
    bs = batch * seq
    scale = 1.0 / math.sqrt(HEAD_DIM)
    inv_h = 1.0 / HIDDEN
    inv_sqrt2 = 1.0 / math.sqrt(2.0)

    # ---- hoisted once (NOT per layer) ---------------------------------------
    lane = jax.lax.broadcasted_iota(jnp.int32, (1, HP), 1)
    hid_mask = (lane < HIDDEN).astype(jnp.float32)          # real hidden lanes
    lane_h = jax.lax.broadcasted_iota(jnp.int32, (1, HIDDEN), 1)
    head_masks = [
        jnp.logical_and(lane_h >= h * HEAD_DIM,
                        lane_h < (h + 1) * HEAD_DIM).astype(jnp.float32)
        for h in range(NUM_HEADS)]
    score_bias = bias_ref[...]                               # (bs, bs): 0 / -1e30
    cvec = cvec_ref[...]                                     # (8, 128)

    def layer_norm(x, g, b):
        # LayerNorm over the real HIDDEN lanes; pad lanes are exactly zero.
        mu = jnp.sum(x, axis=-1, keepdims=True) * inv_h
        xc = (x - mu) * hid_mask
        var = jnp.sum(xc * xc, axis=-1, keepdims=True) * inv_h
        return xc * jax.lax.rsqrt(var + LN_EPS) * g + b

    # ---- embedding LayerNorm (word+pos+type already summed in JAX glue) -----
    h = layer_norm(emb_ref[...],
                   cvec[C_EMB_G:C_EMB_G + 1, :],
                   cvec[C_EMB_B:C_EMB_B + 1, :])             # (bs, HP) f32

    # ---- statically unrolled encoder layers ----------------------------------
    for l in range(NUM_LAYERS):
        vl = vecs_ref[l]                                     # (VROWS, 128)

        q2 = (jnp.dot(h, wq_ref[l], preferred_element_type=jnp.float32)
              + vl[R_BQ:R_BQ + 1, :HIDDEN])                  # (bs, HIDDEN)
        k2 = (jnp.dot(h, wk_ref[l], preferred_element_type=jnp.float32)
              + vl[R_BK:R_BK + 1, :HIDDEN])
        v2 = (jnp.dot(h, wv_ref[l], preferred_element_type=jnp.float32)
              + vl[R_BV:R_BV + 1, :HIDDEN])

        # Per-head attention with column masks: no slices / concats / reshapes.
        # Cross-sequence key positions are killed with an additive -1e30 bias,
        # so the softmax over all bs keys equals the per-sequence softmax.
        ctx = jnp.zeros((bs, HIDDEN), jnp.float32)
        for hm in head_masks:
            sc = jax.lax.dot_general(q2 * hm, k2, (((1,), (1,)), ((), ())),
                                     preferred_element_type=jnp.float32)
            sc = sc * scale + score_bias                     # (bs, bs)
            sc = sc - jnp.max(sc, axis=-1, keepdims=True)
            p = jnp.exp(sc)
            p = p * pl.reciprocal(jnp.sum(p, axis=-1, keepdims=True),
                                  approx=True)
            ctx = ctx + jnp.dot(p, v2 * hm,
                                preferred_element_type=jnp.float32)

        attn = (jnp.dot(ctx, wo_ref[l], preferred_element_type=jnp.float32)
                + vl[R_BO:R_BO + 1, :])                      # (bs, HP)
        x1 = layer_norm(h + attn, vl[R_G1:R_G1 + 1, :], vl[R_B1:R_B1 + 1, :])

        # FFN: up-proj, exact (erf) GELU, down-proj
        inter = (jnp.dot(x1, wi_ref[l], preferred_element_type=jnp.float32)
                 + vl[R_BI:R_BI + 1, :INTERMEDIATE])         # (bs, INTERMEDIATE)
        inter = 0.5 * inter * (1.0 + jax.lax.erf(inter * inv_sqrt2))
        ffn = (jnp.dot(inter, wo2_ref[l], preferred_element_type=jnp.float32)
               + vl[R_BO2:R_BO2 + 1, :])                     # (bs, HP)
        h = layer_norm(x1 + ffn, vl[R_G2:R_G2 + 1, :], vl[R_B2:R_B2 + 1, :])

    # ---- classifier on the last token of each sequence ------------------------
    h3 = h.reshape(batch, seq, HP)                           # native tiling split
    last = jax.lax.slice(h3, (0, seq - 1, 0),
                         (batch, seq, HP)).reshape(batch, HP)
    logits_ref[...] = (jnp.dot(last, wcls_ref[...],
                               preferred_element_type=jnp.float32)
                       + cvec[C_CLS_B:C_CLS_B + 1, :])


def fused_forward(emb_flat, score_bias, pp, batch, seq):
    kernel = functools.partial(bert_fused_kernel, batch=batch, seq=seq)
    # No grid: all arrays are full-block VMEM residents (total < 1 MiB here,
    # far under the scoped VMEM limit on v5e/v6e/v7x).
    return pl.pallas_call(
        kernel,
        out_shape=jax.ShapeDtypeStruct((batch, CP), jnp.float32),
    )(emb_flat, pp['cvec'], score_bias,
      pp['w_q'], pp['w_k'], pp['w_v'], pp['w_o'], pp['w_i'], pp['w_o2'],
      pp['vecs'], pp['w_cls'])


# -----------------------------------------------------------------------------
# Parameters (deterministic synthetic init — no checkpoint files are read)
# -----------------------------------------------------------------------------
def init_params(key):
    keys = iter(jax.random.split(key, 8 + NUM_LAYERS * 8))

    def nrm(shape):
        return 0.02 * jax.random.normal(next(keys), shape, jnp.float32)

    params = {
        'word_emb': nrm((VOCAB, HIDDEN)),
        'pos_emb': nrm((MAX_POS, HIDDEN)),
        'type_emb': nrm((2, HIDDEN)),
        'emb_ln_g': jnp.ones((1, HIDDEN), jnp.float32),
        'emb_ln_b': jnp.zeros((1, HIDDEN), jnp.float32),
        # classifier weight stored transposed vs. torch's (C, H): here (H, C)
        'cls_w': nrm((HIDDEN, NUM_CLASSES)),
        'cls_b': jnp.zeros((1, NUM_CLASSES), jnp.float32),
        'layers': [],
    }
    for _ in range(NUM_LAYERS):
        params['layers'].append({
            'wq': nrm((HIDDEN, HIDDEN)), 'bq': jnp.zeros((1, HIDDEN), jnp.float32),
            'wk': nrm((HIDDEN, HIDDEN)), 'bk': jnp.zeros((1, HIDDEN), jnp.float32),
            'wv': nrm((HIDDEN, HIDDEN)), 'bv': jnp.zeros((1, HIDDEN), jnp.float32),
            'wo': nrm((HIDDEN, HIDDEN)), 'bo': jnp.zeros((1, HIDDEN), jnp.float32),
            'ln1_g': jnp.ones((1, HIDDEN), jnp.float32),
            'ln1_b': jnp.zeros((1, HIDDEN), jnp.float32),
            'wi': nrm((HIDDEN, INTERMEDIATE)),
            'bi': jnp.zeros((1, INTERMEDIATE), jnp.float32),
            'wo2': nrm((INTERMEDIATE, HIDDEN)),
            'bo2': jnp.zeros((1, HIDDEN), jnp.float32),
            'ln2_g': jnp.ones((1, HIDDEN), jnp.float32),
            'ln2_b': jnp.zeros((1, HIDDEN), jnp.float32),
        })
    return params


def _pad2(x, rows, cols):
    # zero-padding is load-bearing: the kernel's masked LayerNorm and the
    # residual stream rely on every pad row/column being exactly zero.
    return jnp.pad(x, ((0, rows - x.shape[0]), (0, cols - x.shape[1])))


def _row(v):
    return _pad2(v, 1, 128)


def pack_params(p):
    """Pack/pad weights into stacked, lane-dense f32 kernel layout."""
    layers = p['layers']

    def stack(fn):
        return jnp.stack([fn(lp) for lp in layers], axis=0)

    vecs = stack(lambda lp: jnp.concatenate([
        _row(lp['bq']), _row(lp['bk']), _row(lp['bv']), _row(lp['bo']),
        _row(lp['ln1_g']), _row(lp['ln1_b']), _row(lp['bi']), _row(lp['bo2']),
        _row(lp['ln2_g']), _row(lp['ln2_b']),
        jnp.zeros((VROWS - 10, 128), jnp.float32)], axis=0))
    cvec = jnp.concatenate([
        _row(p['emb_ln_g']), _row(p['emb_ln_b']), _row(p['cls_b']),
        jnp.zeros((5, 128), jnp.float32)], axis=0)

    return {
        'word_emb': p['word_emb'],
        'pos_emb': p['pos_emb'],
        'type_emb': p['type_emb'],
        'cvec': cvec,                                          # (8, 128)
        'vecs': vecs,                                          # (L, 16, 128)
        'w_q': stack(lambda lp: _pad2(lp['wq'], HP, HIDDEN)),  # (L, 128, 32)
        'w_k': stack(lambda lp: _pad2(lp['wk'], HP, HIDDEN)),
        'w_v': stack(lambda lp: _pad2(lp['wv'], HP, HIDDEN)),
        'w_o': stack(lambda lp: _pad2(lp['wo'], HIDDEN, HP)),  # (L, 32, 128)
        'w_i': stack(lambda lp: _pad2(lp['wi'], HP, INTERMEDIATE)),
        'w_o2': stack(lambda lp: _pad2(lp['wo2'], INTERMEDIATE, HP)),
        'w_cls': _pad2(p['cls_w'], HP, CP),                    # (128, 128)
    }


# -----------------------------------------------------------------------------
# Full forward (mirrors Bert.forward)
# -----------------------------------------------------------------------------
@jax.jit
def bert_forward(token_ids, pp):
    B, S = token_ids.shape
    # embedding gathers (data-dependent) stay in plain JAX glue
    emb = (pp['word_emb'][token_ids]
           + pp['pos_emb'][:S][None, :, :]
           + pp['type_emb'][0][None, None, :])
    emb = jnp.pad(emb, ((0, 0), (0, 0), (0, HP - HIDDEN))).reshape(B * S, HP)
    # additive attention bias: 0 within a sequence, -1e30 across sequences
    seq_id = jnp.arange(B * S, dtype=jnp.int32) // S
    score_bias = jnp.where(seq_id[:, None] == seq_id[None, :],
                           0.0, NEG_BIAS).astype(jnp.float32)
    logits_padded = fused_forward(emb, score_bias, pp, B, S)  # one pallas_call
    return logits_padded[:, :NUM_CLASSES]


if __name__ == "__main__":
    key = jax.random.PRNGKey(0)
    pkey, xkey = jax.random.split(key)
    params = pack_params(init_params(pkey))

    batch, seq = 2, 8
    token_ids = jax.random.randint(xkey, (batch, seq), 0, VOCAB, dtype=jnp.int32)

    logits = bert_forward(token_ids, params)
    jax.block_until_ready(logits)
    assert logits.shape == (batch, NUM_CLASSES)
    assert logits.dtype == jnp.float32
    assert bool(jnp.all(jnp.isfinite(logits)))
    # TODO(synk): pretrained checkpoint loading (load_bert) has no Pallas
    # equivalent; weights are synthetic, deterministic initializations.
    print("KERNEL_OK")
</pallas_src>

<mosaic_0001>
module attributes {stable_mosaic.version = 11 : i64} {
  func.func @bert_fused_kernel(%arg0: memref<16x128xf32, #tpu.memory_space<vmem>>, %arg1: memref<8x128xf32, #tpu.memory_space<vmem>>, %arg2: memref<16x16xf32, #tpu.memory_space<vmem>>, %arg3: memref<2x128x32xf32, #tpu.memory_space<vmem>>, %arg4: memref<2x128x32xf32, #tpu.memory_space<vmem>>, %arg5: memref<2x128x32xf32, #tpu.memory_space<vmem>>, %arg6: memref<2x32x128xf32, #tpu.memory_space<vmem>>, %arg7: memref<2x128x64xf32, #tpu.memory_space<vmem>>, %arg8: memref<2x64x128xf32, #tpu.memory_space<vmem>>, %arg9: memref<2x16x128xf32, #tpu.memory_space<vmem>>, %arg10: memref<128x128xf32, #tpu.memory_space<vmem>>, %arg11: memref<2x128xf32, #tpu.memory_space<vmem>>) attributes {dimension_semantics = [], scalar_prefetch = 0 : i64, scratch_operands = 0 : i64, tpu.core_type = #tpu.core_type<tc>} {
    %0 = tpu.iota {dimensions = array<i32: 1>} : vector<1x128xi32>
    %c32_i32 = arith.constant 32 : i32
    %1 = vector.broadcast %c32_i32 : i32 to vector<1x128xi32>
    %2 = arith.cmpi slt, %0, %1 : vector<1x128xi32>
    %3 = arith.extui %2 : vector<1x128xi1> to vector<1x128xi32>
    %4 = arith.sitofp %3 : vector<1x128xi32> to vector<1x128xf32>
    %5 = tpu.iota {dimensions = array<i32: 1>} : vector<1x32xi32>
    %c0_i32 = arith.constant 0 : i32
    %6 = vector.broadcast %c0_i32 : i32 to vector<1x32xi32>
    %7 = arith.cmpi sge, %5, %6 : vector<1x32xi32>
    %c8_i32 = arith.constant 8 : i32
    %8 = vector.broadcast %c8_i32 : i32 to vector<1x32xi32>
    %9 = arith.cmpi slt, %5, %8 : vector<1x32xi32>
    %10 = arith.andi %7, %9 : vector<1x32xi1>
    %11 = arith.extui %10 : vector<1x32xi1> to vector<1x32xi32>
    %12 = arith.sitofp %11 : vector<1x32xi32> to vector<1x32xf32>
    %c8_i32_0 = arith.constant 8 : i32
    %13 = vector.broadcast %c8_i32_0 : i32 to vector<1x32xi32>
    %14 = arith.cmpi sge, %5, %13 : vector<1x32xi32>
    %c16_i32 = arith.constant 16 : i32
    %15 = vector.broadcast %c16_i32 : i32 to vector<1x32xi32>
    %16 = arith.cmpi slt, %5, %15 : vector<1x32xi32>
    %17 = arith.andi %14, %16 : vector<1x32xi1>
    %18 = arith.extui %17 : vector<1x32xi1> to vector<1x32xi32>
    %19 = arith.sitofp %18 : vector<1x32xi32> to vector<1x32xf32>
    %c16_i32_1 = arith.constant 16 : i32
    %20 = vector.broadcast %c16_i32_1 : i32 to vector<1x32xi32>
    %21 = arith.cmpi sge, %5, %20 : vector<1x32xi32>
    %c24_i32 = arith.constant 24 : i32
    %22 = vector.broadcast %c24_i32 : i32 to vector<1x32xi32>
    %23 = arith.cmpi slt, %5, %22 : vector<1x32xi32>
    %24 = arith.andi %21, %23 : vector<1x32xi1>
    %25 = arith.extui %24 : vector<1x32xi1> to vector<1x32xi32>
    %26 = arith.sitofp %25 : vector<1x32xi32> to vector<1x32xf32>
    %c24_i32_2 = arith.constant 24 : i32
    %27 = vector.broadcast %c24_i32_2 : i32 to vector<1x32xi32>
    %28 = arith.cmpi sge, %5, %27 : vector<1x32xi32>
    %c32_i32_3 = arith.constant 32 : i32
    %29 = vector.broadcast %c32_i32_3 : i32 to vector<1x32xi32>
    %30 = arith.cmpi slt, %5, %29 : vector<1x32xi32>
    %31 = arith.andi %28, %30 : vector<1x32xi1>
    %32 = arith.extui %31 : vector<1x32xi1> to vector<1x32xi32>
    %33 = arith.sitofp %32 : vector<1x32xi32> to vector<1x32xf32>
    %c0 = arith.constant 0 : index
    %c0_4 = arith.constant 0 : index
    %34 = vector.load %arg2[%c0, %c0_4] : memref<16x16xf32, #tpu.memory_space<vmem>>, vector<16x16xf32>
    %c0_5 = arith.constant 0 : index
    %c0_6 = arith.constant 0 : index
    %35 = vector.load %arg1[%c0_5, %c0_6] : memref<8x128xf32, #tpu.memory_space<vmem>>, vector<8x128xf32>
    %c0_7 = arith.constant 0 : index
    %c0_8 = arith.constant 0 : index
    %36 = vector.load %arg0[%c0_7, %c0_8] : memref<16x128xf32, #tpu.memory_space<vmem>>, vector<16x128xf32>
    %37 = vector.extract_strided_slice %35 {offsets = [0, 0], sizes = [1, 128], strides = [1, 1]} : vector<8x128xf32> to vector<1x128xf32>
    %38 = vector.extract_strided_slice %35 {offsets = [1, 0], sizes = [1, 128], strides = [1, 1]} : vector<8x128xf32> to vector<1x128xf32>
    %cst = arith.constant dense<0.000000e+00> : vector<16xf32>
    %39 = vector.multi_reduction <add>, %36, %cst [1] : vector<16x128xf32> to vector<16xf32>
    %40 = vector.shape_cast %39 : vector<16xf32> to vector<16x1xf32>
    %cst_9 = arith.constant 3.125000e-02 : f32
    %41 = vector.broadcast %cst_9 : f32 to vector<16x1xf32>
    %42 = arith.mulf %40, %41 : vector<16x1xf32>
    %43 = vector.broadcast %42 : vector<16x1xf32> to vector<16x128xf32>
    %44 = arith.subf %36, %43 : vector<16x128xf32>
    %45 = vector.broadcast %4 : vector<1x128xf32> to vector<16x128xf32>
    %46 = arith.mulf %44, %45 : vector<16x128xf32>
    %47 = arith.mulf %46, %46 : vector<16x128xf32>
    %cst_10 = arith.constant dense<0.000000e+00> : vector<16xf32>
    %48 = vector.multi_reduction <add>, %47, %cst_10 [1] : vector<16x128xf32> to vector<16xf32>
    %49 = vector.shape_cast %48 : vector<16xf32> to vector<16x1xf32>
    %cst_11 = arith.constant 3.125000e-02 : f32
    %50 = vector.broadcast %cst_11 : f32 to vector<16x1xf32>
    %51 = arith.mulf %49, %50 : vector<16x1xf32>
    %cst_12 = arith.constant 9.99999996E-13 : f32
    %52 = vector.broadcast %cst_12 : f32 to vector<16x1xf32>
    %53 = arith.addf %51, %52 : vector<16x1xf32>
    %54 = math.rsqrt %53 : vector<16x1xf32>
    %55 = vector.broadcast %54 : vector<16x1xf32> to vector<16x128xf32>
    %56 = arith.mulf %46, %55 : vector<16x128xf32>
    %57 = vector.broadcast %37 : vector<1x128xf32> to vector<16x128xf32>
    %58 = arith.mulf %56, %57 : vector<16x128xf32>
    %59 = vector.broadcast %38 : vector<1x128xf32> to vector<16x128xf32>
    %60 = arith.addf %58, %59 : vector<16x128xf32>
    %c0_13 = arith.constant 0 : index
    %c0_14 = arith.constant 0 : index
    %c0_15 = arith.constant 0 : index
    %61 = vector.load %arg9[%c0_13, %c0_14, %c0_15] : memref<2x16x128xf32, #tpu.memory_space<vmem>>, vector<1x16x128xf32>
    %62 = vector.shape_cast %61 : vector<1x16x128xf32> to vector<16x128xf32>
    %c0_16 = arith.constant 0 : index
    %c0_17 = arith.constant 0 : index
    %c0_18 = arith.constant 0 : index
    %63 = vector.load %arg3[%c0_16, %c0_17, %c0_18] : memref<2x128x32xf32, #tpu.memory_space<vmem>>, vector<1x128x32xf32>
    %64 = vector.shape_cast %63 : vector<1x128x32xf32> to vector<128x32xf32>
    %cst_19 = arith.constant dense<0.000000e+00> : vector<16x32xf32>
    %65 = tpu.matmul %60, %64, %cst_19 {dimension_numbers = #tpu.dot_dimension_numbers<[1], [0], [0], [1], [0, 0, 1, 1], [], []>} : vector<16x128xf32>, vector<128x32xf32>, vector<16x32xf32> -> vector<16x32xf32>
    %66 = vector.extract_strided_slice %62 {offsets = [0, 0], sizes = [1, 32], strides = [1, 1]} : vector<16x128xf32> to vector<1x32xf32>
    %67 = vector.broadcast %66 : vector<1x32xf32> to vector<16x32xf32>
    %68 = arith.addf %65, %67 : vector<16x32xf32>
    %c0_20 = arith.constant 0 : index
    %c0_21 = arith.constant 0 : index
    %c0_22 = arith.constant 0 : index
    %69 = vector.load %arg4[%c0_20, %c0_21, %c0_22] : memref<2x128x32xf32, #tpu.memory_space<vmem>>, vector<1x128x32xf32>
    %70 = vector.shape_cast %69 : vector<1x128x32xf32> to vector<128x32xf32>
    %cst_23 = arith.constant dense<0.000000e+00> : vector<16x32xf32>
    %71 = tpu.matmul %60, %70, %cst_23 {dimension_numbers = #tpu.dot_dimension_numbers<[1], [0], [0], [1], [0, 0, 1, 1], [], []>} : vector<16x128xf32>, vector<128x32xf32>, vector<16x32xf32> -> vector<16x32xf32>
    %72 = vector.extract_strided_slice %62 {offsets = [1, 0], sizes = [1, 32], strides = [1, 1]} : vector<16x128xf32> to vector<1x32xf32>
    %73 = vector.broadcast %72 : vector<1x32xf32> to vector<16x32xf32>
    %74 = arith.addf %71, %73 : vector<16x32xf32>
    %c0_24 = arith.constant 0 : index
    %c0_25 = arith.constant 0 : index
    %c0_26 = arith.constant 0 : index
    %75 = vector.load %arg5[%c0_24, %c0_25, %c0_26] : memref<2x128x32xf32, #tpu.memory_space<vmem>>, vector<1x128x32xf32>
    %76 = vector.shape_cast %75 : vector<1x128x32xf32> to vector<128x32xf32>
    %cst_27 = arith.constant dense<0.000000e+00> : vector<16x32xf32>
    %77 = tpu.matmul %60, %76, %cst_27 {dimension_numbers = #tpu.dot_dimension_numbers<[1], [0], [0], [1], [0, 0, 1, 1], [], []>} : vector<16x128xf32>, vector<128x32xf32>, vector<16x32xf32> -> vector<16x32xf32>
    %78 = vector.extract_strided_slice %62 {offsets = [2, 0], sizes = [1, 32], strides = [1, 1]} : vector<16x128xf32> to vector<1x32xf32>
    %79 = vector.broadcast %78 : vector<1x32xf32> to vector<16x32xf32>
    %80 = arith.addf %77, %79 : vector<16x32xf32>
    %cst_28 = arith.constant 0.000000e+00 : f32
    %81 = vector.broadcast %cst_28 : f32 to vector<16x32xf32>
    %82 = vector.broadcast %12 : vector<1x32xf32> to vector<16x32xf32>
    %83 = arith.mulf %68, %82 : vector<16x32xf32>
    %cst_29 = arith.constant dense<0.000000e+00> : vector<16x16xf32>
    %84 = tpu.matmul %83, %74, %cst_29 {dimension_numbers = #tpu.dot_dimension_numbers<[1], [1], [0], [0], [0, 0, 1, 0], [], []>} : vector<16x32xf32>, vector<16x32xf32>, vector<16x16xf32> -> vector<16x16xf32>
    %cst_30 = arith.constant 0.353553385 : f32
    %85 = vector.broadcast %cst_30 : f32 to vector<16x16xf32>
    %86 = arith.mulf %84, %85 : vector<16x16xf32>
    %87 = arith.addf %86, %34 : vector<16x16xf32>
    %cst_31 = arith.constant dense<0xFF800000> : vector<16xf32>
    %88 = vector.multi_reduction <maximumf>, %87, %cst_31 [1] : vector<16x16xf32> to vector<16xf32>
    %89 = vector.shape_cast %88 : vector<16xf32> to vector<16x1xf32>
    %90 = vector.broadcast %89 : vector<16x1xf32> to vector<16x16xf32>
    %91 = arith.subf %87, %90 : vector<16x16xf32>
    %92 = math.exp %91 : vector<16x16xf32>
    %cst_32 = arith.constant dense<0.000000e+00> : vector<16xf32>
    %93 = vector.multi_reduction <add>, %92, %cst_32 [1] : vector<16x16xf32> to vector<16xf32>
    %94 = vector.shape_cast %93 : vector<16xf32> to vector<16x1xf32>
    %95 = tpu.reciprocal %94 {approx = true} : vector<16x1xf32> -> vector<16x1xf32>
    %96 = vector.broadcast %95 : vector<16x1xf32> to vector<16x16xf32>
    %97 = arith.mulf %92, %96 : vector<16x16xf32>
    %98 = vector.broadcast %12 : vector<1x32xf32> to vector<16x32xf32>
    %99 = arith.mulf %80, %98 : vector<16x32xf32>
    %cst_33 = arith.constant dense<0.000000e+00> : vector<16x32xf32>
    %100 = tpu.matmul %97, %99, %cst_33 {dimension_numbers = #tpu.dot_dimension_numbers<[1], [0], [0], [1], [0, 0, 1, 1], [], []>} : vector<16x16xf32>, vector<16x32xf32>, vector<16x32xf32> -> vector<16x32xf32>
    %101 = arith.addf %81, %100 : vector<16x32xf32>
    %102 = vector.broadcast %19 : vector<1x32xf32> to vector<16x32xf32>
    %103 = arith.mulf %68, %102 : vector<16x32xf32>
    %cst_34 = arith.constant dense<0.000000e+00> : vector<16x16xf32>
    %104 = tpu.matmul %103, %74, %cst_34 {dimension_numbers = #tpu.dot_dimension_numbers<[1], [1], [0], [0], [0, 0, 1, 0], [], []>} : vector<16x32xf32>, vector<16x32xf32>, vector<16x16xf32> -> vector<16x16xf32>
    %cst_35 = arith.constant 0.353553385 : f32
    %105 = vector.broadcast %cst_35 : f32 to vector<16x16xf32>
    %106 = arith.mulf %104, %105 : vector<16x16xf32>
    %107 = arith.addf %106, %34 : vector<16x16xf32>
    %cst_36 = arith.constant dense<0xFF800000> : vector<16xf32>
    %108 = vector.multi_reduction <maximumf>, %107, %cst_36 [1] : vector<16x16xf32> to vector<16xf32>
    %109 = vector.shape_cast %108 : vector<16xf32> to vector<16x1xf32>
    %110 = vector.broadcast %109 : vector<16x1xf32> to vector<16x16xf32>
    %111 = arith.subf %107, %110 : vector<16x16xf32>
    %112 = math.exp %111 : vector<16x16xf32>
    %cst_37 = arith.constant dense<0.000000e+00> : vector<16xf32>
    %113 = vector.multi_reduction <add>, %112, %cst_37 [1] : vector<16x16xf32> to vector<16xf32>
    %114 = vector.shape_cast %113 : vector<16xf32> to vector<16x1xf32>
    %115 = tpu.reciprocal %114 {approx = true} : vector<16x1xf32> -> vector<16x1xf32>
    %116 = vector.broadcast %115 : vector<16x1xf32> to vector<16x16xf32>
    %117 = arith.mulf %112, %116 : vector<16x16xf32>
    %118 = vector.broadcast %19 : vector<1x32xf32> to vector<16x32xf32>
    %119 = arith.mulf %80, %118 : vector<16x32xf32>
    %cst_38 = arith.constant dense<0.000000e+00> : vector<16x32xf32>
    %120 = tpu.matmul %117, %119, %cst_38 {dimension_numbers = #tpu.dot_dimension_numbers<[1], [0], [0], [1], [0, 0, 1, 1], [], []>} : vector<16x16xf32>, vector<16x32xf32>, vector<16x32xf32> -> vector<16x32xf32>
    %121 = arith.addf %101, %120 : vector<16x32xf32>
    %122 = vector.broadcast %26 : vector<1x32xf32> to vector<16x32xf32>
    %123 = arith.mulf %68, %122 : vector<16x32xf32>
    %cst_39 = arith.constant dense<0.000000e+00> : vector<16x16xf32>
    %124 = tpu.matmul %123, %74, %cst_39 {dimension_numbers = #tpu.dot_dimension_numbers<[1], [1], [0], [0], [0, 0, 1, 0], [], []>} : vector<16x32xf32>, vector<16x32xf32>, vector<16x16xf32> -> vector<16x16xf32>
    %cst_40 = arith.constant 0.353553385 : f32
    %125 = vector.broadcast %cst_40 : f32 to vector<16x16xf32>
    %126 = arith.mulf %124, %125 : vector<16x16xf32>
    %127 = arith.addf %126, %34 : vector<16x16xf32>
    %cst_41 = arith.constant dense<0xFF800000> : vector<16xf32>
    %128 = vector.multi_reduction <maximumf>, %127, %cst_41 [1] : vector<16x16xf32> to vector<16xf32>
    %129 = vector.shape_cast %128 : vector<16xf32> to vector<16x1xf32>
    %130 = vector.broadcast %129 : vector<16x1xf32> to vector<16x16xf32>
    %131 = arith.subf %127, %130 : vector<16x16xf32>
    %132 = math.exp %131 : vector<16x16xf32>
    %cst_42 = arith.constant dense<0.000000e+00> : vector<16xf32>
    %133 = vector.multi_reduction <add>, %132, %cst_42 [1] : vector<16x16xf32> to vector<16xf32>
    %134 = vector.shape_cast %133 : vector<16xf32> to vector<16x1xf32>
    %135 = tpu.reciprocal %134 {approx = true} : vector<16x1xf32> -> vector<16x1xf32>
    %136 = vector.broadcast %135 : vector<16x1xf32> to vector<16x16xf32>
    %137 = arith.mulf %132, %136 : vector<16x16xf32>
    %138 = vector.broadcast %26 : vector<1x32xf32> to vector<16x32xf32>
    %139 = arith.mulf %80, %138 : vector<16x32xf32>
    %cst_43 = arith.constant dense<0.000000e+00> : vector<16x32xf32>
    %140 = tpu.matmul %137, %139, %cst_43 {dimension_numbers = #tpu.dot_dimension_numbers<[1], [0], [0], [1], [0, 0, 1, 1], [], []>} : vector<16x16xf32>, vector<16x32xf32>, vector<16x32xf32> -> vector<16x32xf32>
    %141 = arith.addf %121, %140 : vector<16x32xf32>
    %142 = vector.broadcast %33 : vector<1x32xf32> to vector<16x32xf32>
    %143 = arith.mulf %68, %142 : vector<16x32xf32>
    %cst_44 = arith.constant dense<0.000000e+00> : vector<16x16xf32>
    %144 = tpu.matmul %143, %74, %cst_44 {dimension_numbers = #tpu.dot_dimension_numbers<[1], [1], [0], [0], [0, 0, 1, 0], [], []>} : vector<16x32xf32>, vector<16x32xf32>, vector<16x16xf32> -> vector<16x16xf32>
    %cst_45 = arith.constant 0.353553385 : f32
    %145 = vector.broadcast %cst_45 : f32 to vector<16x16xf32>
    %146 = arith.mulf %144, %145 : vector<16x16xf32>
    %147 = arith.addf %146, %34 : vector<16x16xf32>
    %cst_46 = arith.constant dense<0xFF800000> : vector<16xf32>
    %148 = vector.multi_reduction <maximumf>, %147, %cst_46 [1] : vector<16x16xf32> to vector<16xf32>
    %149 = vector.shape_cast %148 : vector<16xf32> to vector<16x1xf32>
    %150 = vector.broadcast %149 : vector<16x1xf32> to vector<16x16xf32>
    %151 = arith.subf %147, %150 : vector<16x16xf32>
    %152 = math.exp %151 : vector<16x16xf32>
    %cst_47 = arith.constant dense<0.000000e+00> : vector<16xf32>
    %153 = vector.multi_reduction <add>, %152, %cst_47 [1] : vector<16x16xf32> to vector<16xf32>
    %154 = vector.shape_cast %153 : vector<16xf32> to vector<16x1xf32>
    %155 = tpu.reciprocal %154 {approx = true} : vector<16x1xf32> -> vector<16x1xf32>
    %156 = vector.broadcast %155 : vector<16x1xf32> to vector<16x16xf32>
    %157 = arith.mulf %152, %156 : vector<16x16xf32>
    %158 = vector.broadcast %33 : vector<1x32xf32> to vector<16x32xf32>
    %159 = arith.mulf %80, %158 : vector<16x32xf32>
    %cst_48 = arith.constant dense<0.000000e+00> : vector<16x32xf32>
    %160 = tpu.matmul %157, %159, %cst_48 {dimension_numbers = #tpu.dot_dimension_numbers<[1], [0], [0], [1], [0, 0, 1, 1], [], []>} : vector<16x16xf32>, vector<16x32xf32>, vector<16x32xf32> -> vector<16x32xf32>
    %161 = arith.addf %141, %160 : vector<16x32xf32>
    %c0_49 = arith.constant 0 : index
    %c0_50 = arith.constant 0 : index
    %c0_51 = arith.constant 0 : index
    %162 = vector.load %arg6[%c0_49, %c0_50, %c0_51] : memref<2x32x128xf32, #tpu.memory_space<vmem>>, vector<1x32x128xf32>
    %163 = vector.shape_cast %162 : vector<1x32x128xf32> to vector<32x128xf32>
    %cst_52 = arith.constant dense<0.000000e+00> : vector<16x128xf32>
    %164 = tpu.matmul %161, %163, %cst_52 {dimension_numbers = #tpu.dot_dimension_numbers<[1], [0], [0], [1], [0, 0, 1, 1], [], []>} : vector<16x32xf32>, vector<32x128xf32>, vector<16x128xf32> -> vector<16x128xf32>
    %165 = vector.extract_strided_slice %62 {offsets = [3, 0], sizes = [1, 128], strides = [1, 1]} : vector<16x128xf32> to vector<1x128xf32>
    %166 = vector.broadcast %165 : vector<1x128xf32> to vector<16x128xf32>
    %167 = arith.addf %164, %166 : vector<16x128xf32>
    %168 = arith.addf %60, %167 : vector<16x128xf32>
    %169 = vector.extract_strided_slice %62 {offsets = [4, 0], sizes = [1, 128], strides = [1, 1]} : vector<16x128xf32> to vector<1x128xf32>
    %170 = vector.extract_strided_slice %62 {offsets = [5, 0], sizes = [1, 128], strides = [1, 1]} : vector<16x128xf32> to vector<1x128xf32>
    %cst_53 = arith.constant dense<0.000000e+00> : vector<16xf32>
    %171 = vector.multi_reduction <add>, %168, %cst_53 [1] : vector<16x128xf32> to vector<16xf32>
    %172 = vector.shape_cast %171 : vector<16xf32> to vector<16x1xf32>
    %cst_54 = arith.constant 3.125000e-02 : f32
    %173 = vector.broadcast %cst_54 : f32 to vector<16x1xf32>
    %174 = arith.mulf %172, %173 : vector<16x1xf32>
    %175 = vector.broadcast %174 : vector<16x1xf32> to vector<16x128xf32>
    %176 = arith.subf %168, %175 : vector<16x128xf32>
    %177 = vector.broadcast %4 : vector<1x128xf32> to vector<16x128xf32>
    %178 = arith.mulf %176, %177 : vector<16x128xf32>
    %179 = arith.mulf %178, %178 : vector<16x128xf32>
    %cst_55 = arith.constant dense<0.000000e+00> : vector<16xf32>
    %180 = vector.multi_reduction <add>, %179, %cst_55 [1] : vector<16x128xf32> to vector<16xf32>
    %181 = vector.shape_cast %180 : vector<16xf32> to vector<16x1xf32>
    %cst_56 = arith.constant 3.125000e-02 : f32
    %182 = vector.broadcast %cst_56 : f32 to vector<16x1xf32>
    %183 = arith.mulf %181, %182 : vector<16x1xf32>
    %cst_57 = arith.constant 9.99999996E-13 : f32
    %184 = vector.broadcast %cst_57 : f32 to vector<16x1xf32>
    %185 = arith.addf %183, %184 : vector<16x1xf32>
    %186 = math.rsqrt %185 : vector<16x1xf32>
    %187 = vector.broadcast %186 : vector<16x1xf32> to vector<16x128xf32>
    %188 = arith.mulf %178, %187 : vector<16x128xf32>
    %189 = vector.broadcast %169 : vector<1x128xf32> to vector<16x128xf32>
    %190 = arith.mulf %188, %189 : vector<16x128xf32>
    %191 = vector.broadcast %170 : vector<1x128xf32> to vector<16x128xf32>
    %192 = arith.addf %190, %191 : vector<16x128xf32>
    %c0_58 = arith.constant 0 : index
    %c0_59 = arith.constant 0 : index
    %c0_60 = arith.constant 0 : index
    %193 = vector.load %arg7[%c0_58, %c0_59, %c0_60] : memref<2x128x64xf32, #tpu.memory_space<vmem>>, vector<1x128x64xf32>
    %194 = vector.shape_cast %193 : vector<1x128x64xf32> to vector<128x64xf32>
    %cst_61 = arith.constant dense<0.000000e+00> : vector<16x64xf32>
    %195 = tpu.matmul %192, %194, %cst_61 {dimension_numbers = #tpu.dot_dimension_numbers<[1], [0], [0], [1], [0, 0, 1, 1], [], []>} : vector<16x128xf32>, vector<128x64xf32>, vector<16x64xf32> -> vector<16x64xf32>
    %196 = vector.extract_strided_slice %62 {offsets = [6, 0], sizes = [1, 64], strides = [1, 1]} : vector<16x128xf32> to vector<1x64xf32>
    %197 = vector.broadcast %196 : vector<1x64xf32> to vector<16x64xf32>
    %198 = arith.addf %195, %197 : vector<16x64xf32>
    %cst_62 = arith.constant 5.000000e-01 : f32
    %199 = vector.broadcast %cst_62 : f32 to vector<16x64xf32>
    %200 = arith.mulf %199, %198 : vector<16x64xf32>
    %cst_63 = arith.constant 0.707106769 : f32
    %201 = vector.broadcast %cst_63 : f32 to vector<16x64xf32>
    %202 = arith.mulf %198, %201 : vector<16x64xf32>
    %203 = math.erf %202 : vector<16x64xf32>
    %cst_64 = arith.constant 1.000000e+00 : f32
    %204 = vector.broadcast %cst_64 : f32 to vector<16x64xf32>
    %205 = arith.addf %204, %203 : vector<16x64xf32>
    %206 = arith.mulf %200, %205 : vector<16x64xf32>
    %c0_65 = arith.constant 0 : index
    %c0_66 = arith.constant 0 : index
    %c0_67 = arith.constant 0 : index
    %207 = vector.load %arg8[%c0_65, %c0_66, %c0_67] : memref<2x64x128xf32, #tpu.memory_space<vmem>>, vector<1x64x128xf32>
    %208 = vector.shape_cast %207 : vector<1x64x128xf32> to vector<64x128xf32>
    %cst_68 = arith.constant dense<0.000000e+00> : vector<16x128xf32>
    %209 = tpu.matmul %206, %208, %cst_68 {dimension_numbers = #tpu.dot_dimension_numbers<[1], [0], [0], [1], [0, 0, 1, 1], [], []>} : vector<16x64xf32>, vector<64x128xf32>, vector<16x128xf32> -> vector<16x128xf32>
    %210 = vector.extract_strided_slice %62 {offsets = [7, 0], sizes = [1, 128], strides = [1, 1]} : vector<16x128xf32> to vector<1x128xf32>
    %211 = vector.broadcast %210 : vector<1x128xf32> to vector<16x128xf32>
    %212 = arith.addf %209, %211 : vector<16x128xf32>
    %213 = arith.addf %192, %212 : vector<16x128xf32>
    %214 = vector.extract_strided_slice %62 {offsets = [8, 0], sizes = [1, 128], strides = [1, 1]} : vector<16x128xf32> to vector<1x128xf32>
    %215 = vector.extract_strided_slice %62 {offsets = [9, 0], sizes = [1, 128], strides = [1, 1]} : vector<16x128xf32> to vector<1x128xf32>
    %cst_69 = arith.constant dense<0.000000e+00> : vector<16xf32>
    %216 = vector.multi_reduction <add>, %213, %cst_69 [1] : vector<16x128xf32> to vector<16xf32>
    %217 = vector.shape_cast %216 : vector<16xf32> to vector<16x1xf32>
    %cst_70 = arith.constant 3.125000e-02 : f32
    %218 = vector.broadcast %cst_70 : f32 to vector<16x1xf32>
    %219 = arith.mulf %217, %218 : vector<16x1xf32>
    %220 = vector.broadcast %219 : vector<16x1xf32> to vector<16x128xf32>
    %221 = arith.subf %213, %220 : vector<16x128xf32>
    %222 = vector.broadcast %4 : vector<1x128xf32> to vector<16x128xf32>
    %223 = arith.mulf %221, %222 : vector<16x128xf32>
    %224 = arith.mulf %223, %223 : vector<16x128xf32>
    %cst_71 = arith.constant dense<0.000000e+00> : vector<16xf32>
    %225 = vector.multi_reduction <add>, %224, %cst_71 [1] : vector<16x128xf32> to vector<16xf32>
    %226 = vector.shape_cast %225 : vector<16xf32> to vector<16x1xf32>
    %cst_72 = arith.constant 3.125000e-02 : f32
    %227 = vector.broadcast %cst_72 : f32 to vector<16x1xf32>
    %228 = arith.mulf %226, %227 : vector<16x1xf32>
    %cst_73 = arith.constant 9.99999996E-13 : f32
    %229 = vector.broadcast %cst_73 : f32 to vector<16x1xf32>
    %230 = arith.addf %228, %229 : vector<16x1xf32>
    %231 = math.rsqrt %230 : vector<16x1xf32>
    %232 = vector.broadcast %231 : vector<16x1xf32> to vector<16x128xf32>
    %233 = arith.mulf %223, %232 : vector<16x128xf32>
    %234 = vector.broadcast %214 : vector<1x128xf32> to vector<16x128xf32>
    %235 = arith.mulf %233, %234 : vector<16x128xf32>
    %236 = vector.broadcast %215 : vector<1x128xf32> to vector<16x128xf32>
    %237 = arith.addf %235, %236 : vector<16x128xf32>
    %c1 = arith.constant 1 : index
    %c0_74 = arith.constant 0 : index
    %c0_75 = arith.constant 0 : index
    %238 = vector.load %arg9[%c1, %c0_74, %c0_75] : memref<2x16x128xf32, #tpu.memory_space<vmem>>, vector<1x16x128xf32>
    %239 = vector.shape_cast %238 : vector<1x16x128xf32> to vector<16x128xf32>
    %c1_76 = arith.constant 1 : index
    %c0_77 = arith.constant 0 : index
    %c0_78 = arith.constant 0 : index
    %240 = vector.load %arg3[%c1_76, %c0_77, %c0_78] : memref<2x128x32xf32, #tpu.memory_space<vmem>>, vector<1x128x32xf32>
    %241 = vector.shape_cast %240 : vector<1x128x32xf32> to vector<128x32xf32>
    %cst_79 = arith.constant dense<0.000000e+00> : vector<16x32xf32>
    %242 = tpu.matmul %237, %241, %cst_79 {dimension_numbers = #tpu.dot_dimension_numbers<[1], [0], [0], [1], [0, 0, 1, 1], [], []>} : vector<16x128xf32>, vector<128x32xf32>, vector<16x32xf32> -> vector<16x32xf32>
    %243 = vector.extract_strided_slice %239 {offsets = [0, 0], sizes = [1, 32], strides = [1, 1]} : vector<16x128xf32> to vector<1x32xf32>
    %244 = vector.broadcast %243 : vector<1x32xf32> to vector<16x32xf32>
    %245 = arith.addf %242, %244 : vector<16x32xf32>
    %c1_80 = arith.constant 1 : index
    %c0_81 = arith.constant 0 : index
    %c0_82 = arith.constant 0 : index
    %246 = vector.load %arg4[%c1_80, %c0_81, %c0_82] : memref<2x128x32xf32, #tpu.memory_space<vmem>>, vector<1x128x32xf32>
    %247 = vector.shape_cast %246 : vector<1x128x32xf32> to vector<128x32xf32>
    %cst_83 = arith.constant dense<0.000000e+00> : vector<16x32xf32>
    %248 = tpu.matmul %237, %247, %cst_83 {dimension_numbers = #tpu.dot_dimension_numbers<[1], [0], [0], [1], [0, 0, 1, 1], [], []>} : vector<16x128xf32>, vector<128x32xf32>, vector<16x32xf32> -> vector<16x32xf32>
    %249 = vector.extract_strided_slice %239 {offsets = [1, 0], sizes = [1, 32], strides = [1, 1]} : vector<16x128xf32> to vector<1x32xf32>
    %250 = vector.broadcast %249 : vector<1x32xf32> to vector<16x32xf32>
    %251 = arith.addf %248, %250 : vector<16x32xf32>
    %c1_84 = arith.constant 1 : index
    %c0_85 = arith.constant 0 : index
    %c0_86 = arith.constant 0 : index
    %252 = vector.load %arg5[%c1_84, %c0_85, %c0_86] : memref<2x128x32xf32, #tpu.memory_space<vmem>>, vector<1x128x32xf32>
    %253 = vector.shape_cast %252 : vector<1x128x32xf32> to vector<128x32xf32>
    %cst_87 = arith.constant dense<0.000000e+00> : vector<16x32xf32>
    %254 = tpu.matmul %237, %253, %cst_87 {dimension_numbers = #tpu.dot_dimension_numbers<[1], [0], [0], [1], [0, 0, 1, 1], [], []>} : vector<16x128xf32>, vector<128x32xf32>, vector<16x32xf32> -> vector<16x32xf32>
    %255 = vector.extract_strided_slice %239 {offsets = [2, 0], sizes = [1, 32], strides = [1, 1]} : vector<16x128xf32> to vector<1x32xf32>
    %256 = vector.broadcast %255 : vector<1x32xf32> to vector<16x32xf32>
    %257 = arith.addf %254, %256 : vector<16x32xf32>
    %cst_88 = arith.constant 0.000000e+00 : f32
    %258 = vector.broadcast %cst_88 : f32 to vector<16x32xf32>
    %259 = vector.broadcast %12 : vector<1x32xf32> to vector<16x32xf32>
    %260 = arith.mulf %245, %259 : vector<16x32xf32>
    %cst_89 = arith.constant dense<0.000000e+00> : vector<16x16xf32>
    %261 = tpu.matmul %260, %251, %cst_89 {dimension_numbers = #tpu.dot_dimension_numbers<[1], [1], [0], [0], [0, 0, 1, 0], [], []>} : vector<16x32xf32>, vector<16x32xf32>, vector<16x16xf32> -> vector<16x16xf32>
    %cst_90 = arith.constant 0.353553385 : f32
    %262 = vector.broadcast %cst_90 : f32 to vector<16x16xf32>
    %263 = arith.mulf %261, %262 : vector<16x16xf32>
    %264 = arith.addf %263, %34 : vector<16x16xf32>
    %cst_91 = arith.constant dense<0xFF800000> : vector<16xf32>
    %265 = vector.multi_reduction <maximumf>, %264, %cst_91 [1] : vector<16x16xf32> to vector<16xf32>
    %266 = vector.shape_cast %265 : vector<16xf32> to vector<16x1xf32>
    %267 = vector.broadcast %266 : vector<16x1xf32> to vector<16x16xf32>
    %268 = arith.subf %264, %267 : vector<16x16xf32>
    %269 = math.exp %268 : vector<16x16xf32>
    %cst_92 = arith.constant dense<0.000000e+00> : vector<16xf32>
    %270 = vector.multi_reduction <add>, %269, %cst_92 [1] : vector<16x16xf32> to vector<16xf32>
    %271 = vector.shape_cast %270 : vector<16xf32> to vector<16x1xf32>
    %272 = tpu.reciprocal %271 {approx = true} : vector<16x1xf32> -> vector<16x1xf32>
    %273 = vector.broadcast %272 : vector<16x1xf32> to vector<16x16xf32>
    %274 = arith.mulf %269, %273 : vector<16x16xf32>
    %275 = vector.broadcast %12 : vector<1x32xf32> to vector<16x32xf32>
    %276 = arith.mulf %257, %275 : vector<16x32xf32>
    %cst_93 = arith.constant dense<0.000000e+00> : vector<16x32xf32>
    %277 = tpu.matmul %274, %276, %cst_93 {dimension_numbers = #tpu.dot_dimension_numbers<[1], [0], [0], [1], [0, 0, 1, 1], [], []>} : vector<16x16xf32>, vector<16x32xf32>, vector<16x32xf32> -> vector<16x32xf32>
    %278 = arith.addf %258, %277 : vector<16x32xf32>
    %279 = vector.broadcast %19 : vector<1x32xf32> to vector<16x32xf32>
    %280 = arith.mulf %245, %279 : vector<16x32xf32>
    %cst_94 = arith.constant dense<0.000000e+00> : vector<16x16xf32>
    %281 = tpu.matmul %280, %251, %cst_94 {dimension_numbers = #tpu.dot_dimension_numbers<[1], [1], [0], [0], [0, 0, 1, 0], [], []>} : vector<16x32xf32>, vector<16x32xf32>, vector<16x16xf32> -> vector<16x16xf32>
    %cst_95 = arith.constant 0.353553385 : f32
    %282 = vector.broadcast %cst_95 : f32 to vector<16x16xf32>
    %283 = arith.mulf %281, %282 : vector<16x16xf32>
    %284 = arith.addf %283, %34 : vector<16x16xf32>
    %cst_96 = arith.constant dense<0xFF800000> : vector<16xf32>
    %285 = vector.multi_reduction <maximumf>, %284, %cst_96 [1] : vector<16x16xf32> to vector<16xf32>
    %286 = vector.shape_cast %285 : vector<16xf32> to vector<16x1xf32>
    %287 = vector.broadcast %286 : vector<16x1xf32> to vector<16x16xf32>
    %288 = arith.subf %284, %287 : vector<16x16xf32>
    %289 = math.exp %288 : vector<16x16xf32>
    %cst_97 = arith.constant dense<0.000000e+00> : vector<16xf32>
    %290 = vector.multi_reduction <add>, %289, %cst_97 [1] : vector<16x16xf32> to vector<16xf32>
    %291 = vector.shape_cast %290 : vector<16xf32> to vector<16x1xf32>
    %292 = tpu.reciprocal %291 {approx = true} : vector<16x1xf32> -> vector<16x1xf32>
    %293 = vector.broadcast %292 : vector<16x1xf32> to vector<16x16xf32>
    %294 = arith.mulf %289, %293 : vector<16x16xf32>
    %295 = vector.broadcast %19 : vector<1x32xf32> to vector<16x32xf32>
    %296 = arith.mulf %257, %295 : vector<16x32xf32>
    %cst_98 = arith.constant dense<0.000000e+00> : vector<16x32xf32>
    %297 = tpu.matmul %294, %296, %cst_98 {dimension_numbers = #tpu.dot_dimension_numbers<[1], [0], [0], [1], [0, 0, 1, 1], [], []>} : vector<16x16xf32>, vector<16x32xf32>, vector<16x32xf32> -> vector<16x32xf32>
    %298 = arith.addf %278, %297 : vector<16x32xf32>
    %299 = vector.broadcast %26 : vector<1x32xf32> to vector<16x32xf32>
    %300 = arith.mulf %245, %299 : vector<16x32xf32>
    %cst_99 = arith.constant dense<0.000000e+00> : vector<16x16xf32>
    %301 = tpu.matmul %300, %251, %cst_99 {dimension_numbers = #tpu.dot_dimension_numbers<[1], [1], [0], [0], [0, 0, 1, 0], [], []>} : vector<16x32xf32>, vector<16x32xf32>, vector<16x16xf32> -> vector<16x16xf32>
    %cst_100 = arith.constant 0.353553385 : f32
    %302 = vector.broadcast %cst_100 : f32 to vector<16x16xf32>
    %303 = arith.mulf %301, %302 : vector<16x16xf32>
    %304 = arith.addf %303, %34 : vector<16x16xf32>
    %cst_101 = arith.constant dense<0xFF800000> : vector<16xf32>
    %305 = vector.multi_reduction <maximumf>, %304, %cst_101 [1] : vector<16x16xf32> to vector<16xf32>
    %306 = vector.shape_cast %305 : vector<16xf32> to vector<16x1xf32>
    %307 = vector.broadcast %306 : vector<16x1xf32> to vector<16x16xf32>
    %308 = arith.subf %304, %307 : vector<16x16xf32>
    %309 = math.exp %308 : vector<16x16xf32>
    %cst_102 = arith.constant dense<0.000000e+00> : vector<16xf32>
    %310 = vector.multi_reduction <add>, %309, %cst_102 [1] : vector<16x16xf32> to vector<16xf32>
    %311 = vector.shape_cast %310 : vector<16xf32> to vector<16x1xf32>
    %312 = tpu.reciprocal %311 {approx = true} : vector<16x1xf32> -> vector<16x1xf32>
    %313 = vector.broadcast %312 : vector<16x1xf32> to vector<16x16xf32>
    %314 = arith.mulf %309, %313 : vector<16x16xf32>
    %315 = vector.broadcast %26 : vector<1x32xf32> to vector<16x32xf32>
    %316 = arith.mulf %257, %315 : vector<16x32xf32>
    %cst_103 = arith.constant dense<0.000000e+00> : vector<16x32xf32>
    %317 = tpu.matmul %314, %316, %cst_103 {dimension_numbers = #tpu.dot_dimension_numbers<[1], [0], [0], [1], [0, 0, 1, 1], [], []>} : vector<16x16xf32>, vector<16x32xf32>, vector<16x32xf32> -> vector<16x32xf32>
    %318 = arith.addf %298, %317 : vector<16x32xf32>
    %319 = vector.broadcast %33 : vector<1x32xf32> to vector<16x32xf32>
    %320 = arith.mulf %245, %319 : vector<16x32xf32>
    %cst_104 = arith.constant dense<0.000000e+00> : vector<16x16xf32>
    %321 = tpu.matmul %320, %251, %cst_104 {dimension_numbers = #tpu.dot_dimension_numbers<[1], [1], [0], [0], [0, 0, 1, 0], [], []>} : vector<16x32xf32>, vector<16x32xf32>, vector<16x16xf32> -> vector<16x16xf32>
    %cst_105 = arith.constant 0.353553385 : f32
    %322 = vector.broadcast %cst_105 : f32 to vector<16x16xf32>
    %323 = arith.mulf %321, %322 : vector<16x16xf32>
    %324 = arith.addf %323, %34 : vector<16x16xf32>
    %cst_106 = arith.constant dense<0xFF800000> : vector<16xf32>
    %325 = vector.multi_reduction <maximumf>, %324, %cst_106 [1] : vector<16x16xf32> to vector<16xf32>
    %326 = vector.shape_cast %325 : vector<16xf32> to vector<16x1xf32>
    %327 = vector.broadcast %326 : vector<16x1xf32> to vector<16x16xf32>
    %328 = arith.subf %324, %327 : vector<16x16xf32>
    %329 = math.exp %328 : vector<16x16xf32>
    %cst_107 = arith.constant dense<0.000000e+00> : vector<16xf32>
    %330 = vector.multi_reduction <add>, %329, %cst_107 [1] : vector<16x16xf32> to vector<16xf32>
    %331 = vector.shape_cast %330 : vector<16xf32> to vector<16x1xf32>
    %332 = tpu.reciprocal %331 {approx = true} : vector<16x1xf32> -> vector<16x1xf32>
    %333 = vector.broadcast %332 : vector<16x1xf32> to vector<16x16xf32>
    %334 = arith.mulf %329, %333 : vector<16x16xf32>
    %335 = vector.broadcast %33 : vector<1x32xf32> to vector<16x32xf32>
    %336 = arith.mulf %257, %335 : vector<16x32xf32>
    %cst_108 = arith.constant dense<0.000000e+00> : vector<16x32xf32>
    %337 = tpu.matmul %334, %336, %cst_108 {dimension_numbers = #tpu.dot_dimension_numbers<[1], [0], [0], [1], [0, 0, 1, 1], [], []>} : vector<16x16xf32>, vector<16x32xf32>, vector<16x32xf32> -> vector<16x32xf32>
    %338 = arith.addf %318, %337 : vector<16x32xf32>
    %c1_109 = arith.constant 1 : index
    %c0_110 = arith.constant 0 : index
    %c0_111 = arith.constant 0 : index
    %339 = vector.load %arg6[%c1_109, %c0_110, %c0_111] : memref<2x32x128xf32, #tpu.memory_space<vmem>>, vector<1x32x128xf32>
    %340 = vector.shape_cast %339 : vector<1x32x128xf32> to vector<32x128xf32>
    %cst_112 = arith.constant dense<0.000000e+00> : vector<16x128xf32>
    %341 = tpu.matmul %338, %340, %cst_112 {dimension_numbers = #tpu.dot_dimension_numbers<[1], [0], [0], [1], [0, 0, 1, 1], [], []>} : vector<16x32xf32>, vector<32x128xf32>, vector<16x128xf32> -> vector<16x128xf32>
    %342 = vector.extract_strided_slice %239 {offsets = [3, 0], sizes = [1, 128], strides = [1, 1]} : vector<16x128xf32> to vector<1x128xf32>
    %343 = vector.broadcast %342 : vector<1x128xf32> to vector<16x128xf32>
    %344 = arith.addf %341, %343 : vector<16x128xf32>
    %345 = arith.addf %237, %344 : vector<16x128xf32>
    %346 = vector.extract_strided_slice %239 {offsets = [4, 0], sizes = [1, 128], strides = [1, 1]} : vector<16x128xf32> to vector<1x128xf32>
    %347 = vector.extract_strided_slice %239 {offsets = [5, 0], sizes = [1, 128], strides = [1, 1]} : vector<16x128xf32> to vector<1x128xf32>
    %cst_113 = arith.constant dense<0.000000e+00> : vector<16xf32>
    %348 = vector.multi_reduction <add>, %345, %cst_113 [1] : vector<16x128xf32> to vector<16xf32>
    %349 = vector.shape_cast %348 : vector<16xf32> to vector<16x1xf32>
    %cst_114 = arith.constant 3.125000e-02 : f32
    %350 = vector.broadcast %cst_114 : f32 to vector<16x1xf32>
    %351 = arith.mulf %349, %350 : vector<16x1xf32>
    %352 = vector.broadcast %351 : vector<16x1xf32> to vector<16x128xf32>
    %353 = arith.subf %345, %352 : vector<16x128xf32>
    %354 = vector.broadcast %4 : vector<1x128xf32> to vector<16x128xf32>
    %355 = arith.mulf %353, %354 : vector<16x128xf32>
    %356 = arith.mulf %355, %355 : vector<16x128xf32>
    %cst_115 = arith.constant dense<0.000000e+00> : vector<16xf32>
    %357 = vector.multi_reduction <add>, %356, %cst_115 [1] : vector<16x128xf32> to vector<16xf32>
    %358 = vector.shape_cast %357 : vector<16xf32> to vector<16x1xf32>
    %cst_116 = arith.constant 3.125000e-02 : f32
    %359 = vector.broadcast %cst_116 : f32 to vector<16x1xf32>
    %360 = arith.mulf %358, %359 : vector<16x1xf32>
    %cst_117 = arith.constant 9.99999996E-13 : f32
    %361 = vector.broadcast %cst_117 : f32 to vector<16x1xf32>
    %362 = arith.addf %360, %361 : vector<16x1xf32>
    %363 = math.rsqrt %362 : vector<16x1xf32>
    %364 = vector.broadcast %363 : vector<16x1xf32> to vector<16x128xf32>
    %365 = arith.mulf %355, %364 : vector<16x128xf32>
    %366 = vector.broadcast %346 : vector<1x128xf32> to vector<16x128xf32>
    %367 = arith.mulf %365, %366 : vector<16x128xf32>
    %368 = vector.broadcast %347 : vector<1x128xf32> to vector<16x128xf32>
    %369 = arith.addf %367, %368 : vector<16x128xf32>
    %c1_118 = arith.constant 1 : index
    %c0_119 = arith.constant 0 : index
    %c0_120 = arith.constant 0 : index
    %370 = vector.load %arg7[%c1_118, %c0_119, %c0_120] : memref<2x128x64xf32, #tpu.memory_space<vmem>>, vector<1x128x64xf32>
    %371 = vector.shape_cast %370 : vector<1x128x64xf32> to vector<128x64xf32>
    %cst_121 = arith.constant dense<0.000000e+00> : vector<16x64xf32>
    %372 = tpu.matmul %369, %371, %cst_121 {dimension_numbers = #tpu.dot_dimension_numbers<[1], [0], [0], [1], [0, 0, 1, 1], [], []>} : vector<16x128xf32>, vector<128x64xf32>, vector<16x64xf32> -> vector<16x64xf32>
    %373 = vector.extract_strided_slice %239 {offsets = [6, 0], sizes = [1, 64], strides = [1, 1]} : vector<16x128xf32> to vector<1x64xf32>
    %374 = vector.broadcast %373 : vector<1x64xf32> to vector<16x64xf32>
    %375 = arith.addf %372, %374 : vector<16x64xf32>
    %cst_122 = arith.constant 5.000000e-01 : f32
    %376 = vector.broadcast %cst_122 : f32 to vector<16x64xf32>
    %377 = arith.mulf %376, %375 : vector<16x64xf32>
    %cst_123 = arith.constant 0.707106769 : f32
    %378 = vector.broadcast %cst_123 : f32 to vector<16x64xf32>
    %379 = arith.mulf %375, %378 : vector<16x64xf32>
    %380 = math.erf %379 : vector<16x64xf32>
    %cst_124 = arith.constant 1.000000e+00 : f32
    %381 = vector.broadcast %cst_124 : f32 to vector<16x64xf32>
    %382 = arith.addf %381, %380 : vector<16x64xf32>
    %383 = arith.mulf %377, %382 : vector<16x64xf32>
    %c1_125 = arith.constant 1 : index
    %c0_126 = arith.constant 0 : index
    %c0_127 = arith.constant 0 : index
    %384 = vector.load %arg8[%c1_125, %c0_126, %c0_127] : memref<2x64x128xf32, #tpu.memory_space<vmem>>, vector<1x64x128xf32>
    %385 = vector.shape_cast %384 : vector<1x64x128xf32> to vector<64x128xf32>
    %cst_128 = arith.constant dense<0.000000e+00> : vector<16x128xf32>
    %386 = tpu.matmul %383, %385, %cst_128 {dimension_numbers = #tpu.dot_dimension_numbers<[1], [0], [0], [1], [0, 0, 1, 1], [], []>} : vector<16x64xf32>, vector<64x128xf32>, vector<16x128xf32> -> vector<16x128xf32>
    %387 = vector.extract_strided_slice %239 {offsets = [7, 0], sizes = [1, 128], strides = [1, 1]} : vector<16x128xf32> to vector<1x128xf32>
    %388 = vector.broadcast %387 : vector<1x128xf32> to vector<16x128xf32>
    %389 = arith.addf %386, %388 : vector<16x128xf32>
    %390 = arith.addf %369, %389 : vector<16x128xf32>
    %391 = vector.extract_strided_slice %239 {offsets = [8, 0], sizes = [1, 128], strides = [1, 1]} : vector<16x128xf32> to vector<1x128xf32>
    %392 = vector.extract_strided_slice %239 {offsets = [9, 0], sizes = [1, 128], strides = [1, 1]} : vector<16x128xf32> to vector<1x128xf32>
    %cst_129 = arith.constant dense<0.000000e+00> : vector<16xf32>
    %393 = vector.multi_reduction <add>, %390, %cst_129 [1] : vector<16x128xf32> to vector<16xf32>
    %394 = vector.shape_cast %393 : vector<16xf32> to vector<16x1xf32>
    %cst_130 = arith.constant 3.125000e-02 : f32
    %395 = vector.broadcast %cst_130 : f32 to vector<16x1xf32>
    %396 = arith.mulf %394, %395 : vector<16x1xf32>
    %397 = vector.broadcast %396 : vector<16x1xf32> to vector<16x128xf32>
    %398 = arith.subf %390, %397 : vector<16x128xf32>
    %399 = vector.broadcast %4 : vector<1x128xf32> to vector<16x128xf32>
    %400 = arith.mulf %398, %399 : vector<16x128xf32>
    %401 = arith.mulf %400, %400 : vector<16x128xf32>
    %cst_131 = arith.constant dense<0.000000e+00> : vector<16xf32>
    %402 = vector.multi_reduction <add>, %401, %cst_131 [1] : vector<16x128xf32> to vector<16xf32>
    %403 = vector.shape_cast %402 : vector<16xf32> to vector<16x1xf32>
    %cst_132 = arith.constant 3.125000e-02 : f32
    %404 = vector.broadcast %cst_132 : f32 to vector<16x1xf32>
    %405 = arith.mulf %403, %404 : vector<16x1xf32>
    %cst_133 = arith.constant 9.99999996E-13 : f32
    %406 = vector.broadcast %cst_133 : f32 to vector<16x1xf32>
    %407 = arith.addf %405, %406 : vector<16x1xf32>
    %408 = math.rsqrt %407 : vector<16x1xf32>
    %409 = vector.broadcast %408 : vector<16x1xf32> to vector<16x128xf32>
    %410 = arith.mulf %400, %409 : vector<16x128xf32>
    %411 = vector.broadcast %391 : vector<1x128xf32> to vector<16x128xf32>
    %412 = arith.mulf %410, %411 : vector<16x128xf32>
    %413 = vector.broadcast %392 : vector<1x128xf32> to vector<16x128xf32>
    %414 = arith.addf %412, %413 : vector<16x128xf32>
    %415 = vector.shape_cast %414 : vector<16x128xf32> to vector<2x8x128xf32>
    %416 = vector.extract_strided_slice %415 {offsets = [0, 7, 0], sizes = [2, 1, 128], strides = [1, 1, 1]} : vector<2x8x128xf32> to vector<2x1x128xf32>
    %417 = vector.shape_cast %416 : vector<2x1x128xf32> to vector<2x128xf32>
    %c0_134 = arith.constant 0 : index
    %c0_135 = arith.constant 0 : index
    %418 = vector.load %arg10[%c0_134, %c0_135] : memref<128x128xf32, #tpu.memory_space<vmem>>, vector<128x128xf32>
    %cst_136 = arith.constant dense<0.000000e+00> : vector<2x128xf32>
    %419 = tpu.matmul %417, %418, %cst_136 {dimension_numbers = #tpu.dot_dimension_numbers<[1], [0], [0], [1], [0, 0, 1, 1], [], []>} : vector<2x128xf32>, vector<128x128xf32>, vector<2x128xf32> -> vector<2x128xf32>
    %420 = vector.extract_strided_slice %35 {offsets = [2, 0], sizes = [1, 128], strides = [1, 1]} : vector<8x128xf32> to vector<1x128xf32>
    %421 = vector.broadcast %420 : vector<1x128xf32> to vector<2x128xf32>
    %422 = arith.addf %419, %421 : vector<2x128xf32>
    %c0_137 = arith.constant 0 : index
    %c0_138 = arith.constant 0 : index
    %423 = vector.load %arg11[%c0_137, %c0_138] : memref<2x128xf32, #tpu.memory_space<vmem>>, vector<2x128xf32>
    tpu.vector_store %arg11[%c0_137, %c0_138], %422 {strides = array<i32>} : memref<2x128xf32, #tpu.memory_space<vmem>>, vector<2x128xf32>,
    return
  }
}

</mosaic_0001>

<llo_original>
// kernel: bert_forward.1
$region0: #{bert_forward.1}
  #allocation0 [shape = 'u32[]', space=smem, size = 0x4, offset = 0x4, fixed_abs, tag = 'smem constant byte address 0x4 - core index']
  #allocation1 [shape = 'u32[72,128]{1,0:T(1,128)}', space=vmem, size = 0x9000, scoped, tag = 'internal scratch']
  %s0 = inlined_call_operand.vmem [shape: f32[16,128], index: 0, kind: input, shape index: {}]
  %s1 = inlined_call_operand.vmem [shape: f32[8,128], index: 1, kind: input, shape index: {}]
  %s2 = inlined_call_operand.vmem [shape: f32[16,16], index: 2, kind: input, shape index: {}]
  %s3 = inlined_call_operand.vmem [shape: f32[2,128,32], index: 3, kind: input, shape index: {}]
  %s4 = inlined_call_operand.vmem [shape: f32[2,128,32], index: 4, kind: input, shape index: {}]
  %s5 = inlined_call_operand.vmem [shape: f32[2,128,32], index: 5, kind: input, shape index: {}]
  %s6 = inlined_call_operand.vmem [shape: f32[2,32,128], index: 6, kind: input, shape index: {}]
  %s7 = inlined_call_operand.vmem [shape: f32[2,128,64], index: 7, kind: input, shape index: {}]
  %s8 = inlined_call_operand.vmem [shape: f32[2,64,128], index: 8, kind: input, shape index: {}]
  %s9 = inlined_call_operand.vmem [shape: f32[2,16,128], index: 9, kind: input, shape index: {}]
  %s10 = inlined_call_operand.vmem [shape: f32[128,128], index: 10, kind: input, shape index: {}]
  %s11 = inlined_call_operand.hbm [shape: f32[2,128], index: 11, kind: output, shape index: {}]
  %s12 = sld [smem:[#allocation0]]
  $region54: #{bert_forward.1} parent=0
    _
  %s14 = ssub.s32 1, %s12
  %s15 = scalar_select 0, %s14, %s12
  $region1: #{bert_forward.1} parent=0
    #allocation2 [shape = 'u8[1024]{0}', space=vmem, size = 0x400, scoped, tag = 'output window, operand 0, single buffered']
    #allocation3 [shape = 's32[1]{0}', space=sflag, size = 0x4, scoped, tag = 'scoped memory for bert_forward.1']
    %16 = vsyncpa [#allocation3], 0
    // Predicated region
    $region2: #{bert_forward.1} parent=1 // pred_check
      _
    $region3: #{bert_forward.1} parent=1 // pred_check_branch
      %18 = sbr.rel (0) target = $region5
    $region4: #{bert_forward.1} parent=1 // pred_region
      _
    $region5: #{bert_forward.1} parent=1 // pred_fallthru
      _
    // Predicated region
    $region6: #{bert_forward.1} parent=1 // pred_check
      _
    $region7: #{bert_forward.1} parent=1 // pred_check_branch
      %20 = sbr.rel (0) target = $region9
    $region8: #{bert_forward.1} parent=1 // pred_region
      _
    $region9: #{bert_forward.1} parent=1 // pred_fallthru
      _
    // Predicated region
    $region10: #{bert_forward.1} parent=1 // pred_check
      _
    $region11: #{bert_forward.1} parent=1 // pred_check_branch
      %22 = sbr.rel (0) target = $region13
    $region12: #{bert_forward.1} parent=1 // pred_region
      _
    $region13: #{bert_forward.1} parent=1 // pred_fallthru
      _
    // Predicated region
    $region14: #{bert_forward.1} parent=1 // pred_check
      _
    $region15: #{bert_forward.1} parent=1 // pred_check_branch
      %24 = sbr.rel (0) target = $region17
    $region16: #{bert_forward.1} parent=1 // pred_region
      _
    $region17: #{bert_forward.1} parent=1 // pred_fallthru
      _
    // Predicated region
    $region18: #{bert_forward.1} parent=1 // pred_check
      _
    $region19: #{bert_forward.1} parent=1 // pred_check_branch
      %26 = sbr.rel (0) target = $region21
    $region20: #{bert_forward.1} parent=1 // pred_region
      _
    $region21: #{bert_forward.1} parent=1 // pred_fallthru
      _
    // Predicated region
    $region22: #{bert_forward.1} parent=1 // pred_check
      _
    $region23: #{bert_forward.1} parent=1 // pred_check_branch
      %28 = sbr.rel (0) target = $region25
    $region24: #{bert_forward.1} parent=1 // pred_region
      _
    $region25: #{bert_forward.1} parent=1 // pred_fallthru
      _
    // Predicated region
    $region26: #{bert_forward.1} parent=1 // pred_check
      _
    $region27: #{bert_forward.1} parent=1 // pred_check_branch
      %30 = sbr.rel (0) target = $region29
    $region28: #{bert_forward.1} parent=1 // pred_region
      _
    $region29: #{bert_forward.1} parent=1 // pred_fallthru
      _
    // Predicated region
    $region30: #{bert_forward.1} parent=1 // pred_check
      _
    $region31: #{bert_forward.1} parent=1 // pred_check_branch
      %32 = sbr.rel (0) target = $region33
    $region32: #{bert_forward.1} parent=1 // pred_region
      _
    $region33: #{bert_forward.1} parent=1 // pred_fallthru
      _
    // Predicated region
    $region34: #{bert_forward.1} parent=1 // pred_check
      _
    $region35: #{bert_forward.1} parent=1 // pred_check_branch
      %34 = sbr.rel (0) target = $region37
    $region36: #{bert_forward.1} parent=1 // pred_region
      _
    $region37: #{bert_forward.1} parent=1 // pred_fallthru
      _
    // Predicated region
    $region38: #{bert_forward.1} parent=1 // pred_check
      _
    $region39: #{bert_forward.1} parent=1 // pred_check_branch
      %36 = sbr.rel (0) target = $region41
    $region40: #{bert_forward.1} parent=1 // pred_region
      _
    $region41: #{bert_forward.1} parent=1 // pred_fallthru
      _
    // Predicated region
    $region42: #{bert_forward.1} parent=1 // pred_check
      _
    $region43: #{bert_forward.1} parent=1 // pred_check_branch
      %38 = sbr.rel (0) target = $region45
    $region44: #{bert_forward.1} parent=1 // pred_region
      _
    $region45: #{bert_forward.1} parent=1 // pred_fallthru
      _
    %v39 = vlaneseq
    %v40 = vand.u32 %v39, 127
    %vm41 = vcmp.lt.s32.totalorder %v40, 32
    %v42 = vsel %vm41, 1, 0
    %v43 = vcvt.s32.f32 %v42
    %vm44 = vcmp.ge.s32.totalorder %v40, 0
    %vm45 = vcmp.lt.s32.totalorder %v40, 8
    %vm46 = vmand %vm44, %vm45
    %v47 = vsel %vm46, 1, 0
    %v48 = vcvt.s32.f32 %v47
    %vm49 = vcmp.ge.s32.totalorder %v40, 8
    %vm50 = vcmp.lt.s32.totalorder %v40, 16
    %vm51 = vmand %vm49, %vm50
    %v52 = vsel %vm51, 1, 0
    %v53 = vcvt.s32.f32 %v52
    %vm54 = vcmp.ge.s32.totalorder %v40, 16
    %vm55 = vcmp.lt.s32.totalorder %v40, 24
    %vm56 = vmand %vm54, %vm55
    %v57 = vsel %vm56, 1, 0
    %v58 = vcvt.s32.f32 %v57
    %vm59 = vcmp.ge.s32.totalorder %v40, 24
    %vm60 = vmand %vm59, %vm41
    %v61 = vsel %vm60, 1, 0
    %v62 = vcvt.s32.f32 %v61
    %v63 = vld [vmem:[%s2] sm:$0xff]
    %v64 = vld [vmem:[%s2 + $0x8] sm:$0xff]
    %v65 = vld [vmem:[%s1] sm:$0xff]
    %v66 = vld [vmem:[%s0] sm:$0xff]
    %v67 = vld [vmem:[%s0 + $0x8] sm:$0xff]
    %68 = vadd.xlane.f32.xlu0 %v66
    %v69 = vpop.xlane.xlu0 %68
    %70 = vadd.xlane.f32.xlu0 %v67
    %v71 = vpop.xlane.xlu0 %70
    %v72 = vmul.f32 %v69, 0.03125
    %v73 = vmul.f32 %v71, 0.03125
    %v74 = vsub.f32 %v66, %v72
    %v75 = vsub.f32 %v67, %v73
    %v76 = vmul.f32 %v74, %v43
    %v77 = vmul.f32 %v75, %v43
    %v78 = vmul.f32 %v76, %v76
    %v79 = vmul.f32 %v77, %v77
    %80 = vadd.xlane.f32.xlu0 %v78
    %v81 = vpop.xlane.xlu0 %80
    %82 = vadd.xlane.f32.xlu0 %v79
    %v83 = vpop.xlane.xlu0 %82
    %v84 = vmul.f32 %v81, 0.03125
    %v85 = vmul.f32 %v83, 0.03125
    %v86 = vadd.f32 %v84, 1e-12
    %v87 = vadd.f32 %v85, 1e-12
    %v88 = vrsqrt.pop %v86
    %v89 = vmul.f32 %v88, %v86
    %v90 = vmul.f32 %v89, %v88
    %v91 = vmul.f32 0.5, %v90
    %v92 = vsub.f32 1.5, %v91
    %v93 = vmul.f32 %v88, %v92
    %vm94 = vweird.f32 %v86
    %vm95 = vweird.f32 %v88
    %vm96 = vmor %vm94, %vm95
    %v97 = vsel %vm96, %v88, %v93
    %v98 = vrsqrt.pop %v87
    %v99 = vmul.f32 %v98, %v87
    %v100 = vmul.f32 %v99, %v98
    %v101 = vmul.f32 0.5, %v100
    %v102 = vsub.f32 1.5, %v101
    %v103 = vmul.f32 %v98, %v102
    %vm104 = vweird.f32 %v87
    %vm105 = vweird.f32 %v98
    %vm106 = vmor %vm104, %vm105
    %v107 = vsel %vm106, %v98, %v103
    %v108 = vmul.f32 %v76, %v97
    %v109 = vmul.f32 %v77, %v107
    %v110 = vperm.slane %v65, 0
    %v111 = vmul.f32 %v108, %v110
    %v112 = vmul.f32 %v109, %v110
    %v113 = vperm.slane %v65, 1
    %v114 = vadd.f32 %v111, %v113
    %v115 = vadd.f32 %v112, %v113
    %v116 = vld [vmem:[%s9] sm:$0xff]
    %v117 = vld [vmem:[%s9 + $0x8] sm:$0xff]
    %v118 = vld [vmem:[%s3] sm:$0xff]
    %v119 = vld [vmem:[%s3 + $0x8] sm:$0xff]
    %v120 = vld [vmem:[%s3 + $0x10] sm:$0xff]
    %v121 = vld [vmem:[%s3 + $0x18] sm:$0xff]
    %v122 = vld [vmem:[%s3 + $0x20] sm:$0xff]
    %v123 = vld [vmem:[%s3 + $0x28] sm:$0xff]
    %v124 = vld [vmem:[%s3 + $0x30] sm:$0xff]
    %v125 = vld [vmem:[%s3 + $0x38] sm:$0xff]
    %v126 = vld [vmem:[%s3 + $0x40] sm:$0xff]
    %v127 = vld [vmem:[%s3 + $0x48] sm:$0xff]
    %v128 = vld [vmem:[%s3 + $0x50] sm:$0xff]
    %v129 = vld [vmem:[%s3 + $0x58] sm:$0xff]
    %v130 = vld [vmem:[%s3 + $0x60] sm:$0xff]
    %v131 = vld [vmem:[%s3 + $0x68] sm:$0xff]
    %v132 = vld [vmem:[%s3 + $0x70] sm:$0xff]
    %v133 = vld [vmem:[%s3 + $0x78] sm:$0xff]
    %v134 = vperm.slane %v116, 0
    %135 = vmatpush.msra.mxu0 %v133
    %136 = vmatpush.msra.mxu0 %v132
    %137 = vmatpush.msra.mxu0 %v131
    %138 = vmatpush.msra.mxu0 %v130
    %139 = vmatpush.msra.mxu0 %v129
    %140 = vmatpush.msra.mxu0 %v128
    %141 = vmatpush.msra.mxu0 %v127
    %142 = vmatpush.msra.mxu0 %v126
    %143 = vmatpush.msra.mxu0 %v125
    %144 = vmatpush.msra.mxu0 %v124
    %145 = vmatpush.msra.mxu0 %v123
    %146 = vmatpush.msra.mxu0 %v122
    %147 = vmatpush.msra.mxu0 %v121
    %148 = vmatpush.msra.mxu0 %v120
    %149 = vmatpush.msra.mxu0 %v119
    %150 = vmatpush.msra.mxu0 %v118
    %151 = vmatmul.f32.gmra.mxu0 %v114
    %v152 = vpop.f32.mrf.mxu0
    %v153 = vadd.f32 %v134, %v152
    %154 = vmatmul.f32.gmra.mxu0 %v115
    %v155 = vpop.f32.mrf.mxu0
    %v156 = vadd.f32 %v134, %v155
    %157 = vdwg.mxu0
    %v158 = vld [vmem:[%s4] sm:$0xff]
    %v159 = vld [vmem:[%s4 + $0x8] sm:$0xff]
    %v160 = vld [vmem:[%s4 + $0x10] sm:$0xff]
    %v161 = vld [vmem:[%s4 + $0x18] sm:$0xff]
    %v162 = vld [vmem:[%s4 + $0x20] sm:$0xff]
    %v163 = vld [vmem:[%s4 + $0x28] sm:$0xff]
    %v164 = vld [vmem:[%s4 + $0x30] sm:$0xff]
    %v165 = vld [vmem:[%s4 + $0x38] sm:$0xff]
    %v166 = vld [vmem:[%s4 + $0x40] sm:$0xff]
    %v167 = vld [vmem:[%s4 + $0x48] sm:$0xff]
    %v168 = vld [vmem:[%s4 + $0x50] sm:$0xff]
    %v169 = vld [vmem:[%s4 + $0x58] sm:$0xff]
    %v170 = vld [vmem:[%s4 + $0x60] sm:$0xff]
    %v171 = vld [vmem:[%s4 + $0x68] sm:$0xff]
    %v172 = vld [vmem:[%s4 + $0x70] sm:$0xff]
    %v173 = vld [vmem:[%s4 + $0x78] sm:$0xff]
    %v174 = vperm.slane %v116, 1
    %175 = vmatpush.msra.mxu0 %v173
    %176 = vmatpush.msra.mxu0 %v172
    %177 = vmatpush.msra.mxu0 %v171
    %178 = vmatpush.msra.mxu0 %v170
    %179 = vmatpush.msra.mxu0 %v169
    %180 = vmatpush.msra.mxu0 %v168
    %181 = vmatpush.msra.mxu0 %v167
    %182 = vmatpush.msra.mxu0 %v166
    %183 = vmatpush.msra.mxu0 %v165
    %184 = vmatpush.msra.mxu0 %v164
    %185 = vmatpush.msra.mxu0 %v163
    %186 = vmatpush.msra.mxu0 %v162
    %187 = vmatpush.msra.mxu0 %v161
    %188 = vmatpush.msra.mxu0 %v160
    %189 = vmatpush.msra.mxu0 %v159
    %190 = vmatpush.msra.mxu0 %v158
    %191 = vmatmul.f32.gmra.mxu0 %v114
    %v192 = vpop.f32.mrf.mxu0
    %v193 = vadd.f32 %v174, %v192
    %194 = vmatmul.f32.gmra.mxu0 %v115
    %v195 = vpop.f32.mrf.mxu0
    %v196 = vadd.f32 %v174, %v195
    %197 = vdwg.mxu0
    %v198 = vld [vmem:[%s5] sm:$0xff]
    %v199 = vld [vmem:[%s5 + $0x8] sm:$0xff]
    %v200 = vld [vmem:[%s5 + $0x10] sm:$0xff]
    %v201 = vld [vmem:[%s5 + $0x18] sm:$0xff]
    %v202 = vld [vmem:[%s5 + $0x20] sm:$0xff]
    %v203 = vld [vmem:[%s5 + $0x28] sm:$0xff]
    %v204 = vld [vmem:[%s5 + $0x30] sm:$0xff]
    %v205 = vld [vmem:[%s5 + $0x38] sm:$0xff]
    %v206 = vld [vmem:[%s5 + $0x40] sm:$0xff]
    %v207 = vld [vmem:[%s5 + $0x48] sm:$0xff]
    %v208 = vld [vmem:[%s5 + $0x50] sm:$0xff]
    %v209 = vld [vmem:[%s5 + $0x58] sm:$0xff]
    %v210 = vld [vmem:[%s5 + $0x60] sm:$0xff]
    %v211 = vld [vmem:[%s5 + $0x68] sm:$0xff]
    %v212 = vld [vmem:[%s5 + $0x70] sm:$0xff]
    %v213 = vld [vmem:[%s5 + $0x78] sm:$0xff]
    %v214 = vperm.slane %v116, 2
    %215 = vmatpush.msra.mxu0 %v213
    %216 = vmatpush.msra.mxu0 %v212
    %217 = vmatpush.msra.mxu0 %v211
    %218 = vmatpush.msra.mxu0 %v210
    %219 = vmatpush.msra.mxu0 %v209
    %220 = vmatpush.msra.mxu0 %v208
    %221 = vmatpush.msra.mxu0 %v207
    %222 = vmatpush.msra.mxu0 %v206
    %223 = vmatpush.msra.mxu0 %v205
    %224 = vmatpush.msra.mxu0 %v204
    %225 = vmatpush.msra.mxu0 %v203
    %226 = vmatpush.msra.mxu0 %v202
    %227 = vmatpush.msra.mxu0 %v201
    %228 = vmatpush.msra.mxu0 %v200
    %229 = vmatpush.msra.mxu0 %v199
    %230 = vmatpush.msra.mxu0 %v198
    %231 = vmatmul.f32.gmra.mxu0 %v114
    %v232 = vpop.f32.mrf.mxu0
    %v233 = vadd.f32 %v214, %v232
    %234 = vmatmul.f32.gmra.mxu0 %v115
    %v235 = vpop.f32.mrf.mxu0
    %v236 = vadd.f32 %v214, %v235
    %237 = vdwg.mxu0
    %v238 = vmul.f32 %v153, %v48
    %v239 = vmul.f32 %v156, %v48
    %vm240 = vcmask 261120
    %v242 = vsel %vm240, %v238, 0
    %v245 = vsel %vm240, %v239, 0
    %v248 = vsel %vm240, %v193, 0
    %v251 = vsel %vm240, %v196, 0
    %253 = vmatpush.xpose.msra.mxu0 0.0
    %254 = vmatpush.xpose.msra.mxu0 0.0
    %255 = vmatpush.xpose.msra.mxu0 0.0
    %256 = vmatpush.xpose.msra.mxu0 0.0
    %257 = vmatpush.xpose.msra.mxu0 0.0
    %258 = vmatpush.xpose.msra.mxu0 0.0
    %259 = vmatpush.xpose.msra.mxu0 0.0
    %260 = vmatpush.xpose.msra.mxu0 0.0
    %261 = vmatpush.xpose.msra.mxu0 0.0
    %262 = vmatpush.xpose.msra.mxu0 0.0
    %263 = vmatpush.xpose.msra.mxu0 0.0
    %264 = vmatpush.xpose.msra.mxu0 0.0
    %265 = vmatpush.xpose.msra.mxu0 0.0
    %266 = vmatpush.xpose.msra.mxu0 0.0
    %267 = vmatpush.xpose.msra.mxu0 %v251
    %268 = vmatpush.xpose.msra.mxu0 %v248
    %269 = vmatmul.f32.gmra.mxu0 %v242
    %v270 = vpop.f32.mrf.mxu0
    %v271 = vadd.f32 0.0, %v270
    %272 = vmatmul.f32.gmra.mxu0 %v245
    %v273 = vpop.f32.mrf.mxu0
    %v274 = vadd.f32 0.0, %v273
    %275 = vdwg.mxu0
    %v276 = vmul.f32 %v271, 0.35355338
    %v277 = vmul.f32 %v274, 0.35355338
    %v278 = vadd.f32 %v276, %v63
    %v279 = vadd.f32 %v277, %v64
    %vm280 = vcmask 130048
    %v281 = vsel %vm280, %v278, -inf
    %282 = vmax.xlane.f32.xlu0 %v281
    %v283 = vpop.xlane.xlu0 %282
    %v284 = vsel %vm280, %v279, -inf
    %285 = vmax.xlane.f32.xlu0 %v284
    %v286 = vpop.xlane.xlu0 %285
    %v287 = vsub.f32 %v278, %v283
    %v288 = vsub.f32 %v279, %v286
    %v289 = vmul.f32 %v287, 1.442695
    %v290 = vpow.pop %v289
    %v291 = vmul.f32 %v288, 1.442695
    %v292 = vpow.pop %v291
    %v293 = vsel %vm280, %v290, 0.0
    %294 = vadd.xlane.f32.xlu0 %v293
    %v295 = vpop.xlane.xlu0 %294
    %v296 = vsel %vm280, %v292, 0.0
    %297 = vadd.xlane.f32.xlu0 %v296
    %v298 = vpop.xlane.xlu0 %297
    %v299 = vrcp.pop %v295
    %v300 = vrcp.pop %v298
    %v301 = vmul.f32 %v290, %v299
    %v302 = vmul.f32 %v292, %v300
    %v303 = vmul.f32 %v233, %v48
    %v304 = vmul.f32 %v236, %v48
    %v305 = vmul.f32 %v153, %v53
    %v306 = vmul.f32 %v156, %v53
    %v308 = vsel %vm240, %v305, 0
    %v311 = vsel %vm240, %v306, 0
    %313 = vmatpush.xpose.msra.mxu0 0.0
    %314 = vmatpush.xpose.msra.mxu0 0.0
    %315 = vmatpush.xpose.msra.mxu0 0.0
    %316 = vmatpush.xpose.msra.mxu0 0.0
    %317 = vmatpush.xpose.msra.mxu0 0.0
    %318 = vmatpush.xpose.msra.mxu0 0.0
    %319 = vmatpush.xpose.msra.mxu0 0.0
    %320 = vmatpush.xpose.msra.mxu0 0.0
    %321 = vmatpush.xpose.msra.mxu0 0.0
    %322 = vmatpush.xpose.msra.mxu0 0.0
    %323 = vmatpush.xpose.msra.mxu0 0.0
    %324 = vmatpush.xpose.msra.mxu0 0.0
    %325 = vmatpush.xpose.msra.mxu0 0.0
    %326 = vmatpush.xpose.msra.mxu0 0.0
    %327 = vmatpush.xpose.msra.mxu0 %v251
    %328 = vmatpush.xpose.msra.mxu0 %v248
    %329 = vmatmul.f32.gmra.mxu0 %v308
    %v330 = vpop.f32.mrf.mxu0
    %v331 = vadd.f32 0.0, %v330
    %332 = vmatmul.f32.gmra.mxu0 %v311
    %v333 = vpop.f32.mrf.mxu0
    %v334 = vadd.f32 0.0, %v333
    %335 = vdwg.mxu0
    %v336 = vmul.f32 %v331, 0.35355338
    %v337 = vmul.f32 %v334, 0.35355338
    %v338 = vadd.f32 %v336, %v63
    %v339 = vadd.f32 %v337, %v64
    %v340 = vsel %vm280, %v338, -inf
    %341 = vmax.xlane.f32.xlu0 %v340
    %v342 = vpop.xlane.xlu0 %341
    %v343 = vsel %vm280, %v339, -inf
    %344 = vmax.xlane.f32.xlu0 %v343
    %v345 = vpop.xlane.xlu0 %344
    %v346 = vsub.f32 %v338, %v342
    %v347 = vsub.f32 %v339, %v345
    %v348 = vmul.f32 %v346, 1.442695
    %v349 = vpow.pop %v348
    %v350 = vmul.f32 %v347, 1.442695
    %v351 = vpow.pop %v350
    %v352 = vsel %vm280, %v349, 0.0
    %353 = vadd.xlane.f32.xlu0 %v352
    %v354 = vpop.xlane.xlu0 %353
    %v355 = vsel %vm280, %v351, 0.0
    %356 = vadd.xlane.f32.xlu0 %v355
    %v357 = vpop.xlane.xlu0 %356
    %v358 = vrcp.pop %v354
    %v359 = vrcp.pop %v357
    %v360 = vmul.f32 %v349, %v358
    %v361 = vmul.f32 %v351, %v359
    %v362 = vmul.f32 %v233, %v53
    %v363 = vmul.f32 %v236, %v53
    %v365 = vsel %vm280, %v360, 0
    %v368 = vsel %vm280, %v361, 0
    %370 = vmatpush.msra.mxu0 0.0
    %371 = vmatpush.msra.mxu0 0.0
    %372 = vmatpush.msra.mxu0 0.0
    %373 = vmatpush.msra.mxu0 0.0
    %374 = vmatpush.msra.mxu0 0.0
    %375 = vmatpush.msra.mxu0 0.0
    %376 = vmatpush.msra.mxu0 0.0
    %377 = vmatpush.msra.mxu0 0.0
    %378 = vmatpush.msra.mxu0 0.0
    %379 = vmatpush.msra.mxu0 0.0
    %380 = vmatpush.msra.mxu0 0.0
    %381 = vmatpush.msra.mxu0 0.0
    %382 = vmatpush.msra.mxu0 0.0
    %383 = vmatpush.msra.mxu0 0.0
    %384 = vmatpush.msra.mxu0 %v363
    %385 = vmatpush.msra.mxu0 %v362
    %386 = vmatmul.f32.gmra.mxu0 %v365
    %v387 = vpop.f32.mrf.mxu0
    %v388 = vadd.f32 0.0, %v387
    %389 = vmatmul.f32.gmra.mxu0 %v368
    %v390 = vpop.f32.mrf.mxu0
    %v391 = vadd.f32 0.0, %v390
    %392 = vdwg.mxu0
    %v394 = vsel %vm280, %v301, 0
    %v397 = vsel %vm280, %v302, 0
    %399 = vmatpush.msra.mxu0 0.0
    %400 = vmatpush.msra.mxu0 0.0
    %401 = vmatpush.msra.mxu0 0.0
    %402 = vmatpush.msra.mxu0 0.0
    %403 = vmatpush.msra.mxu0 0.0
    %404 = vmatpush.msra.mxu0 0.0
    %405 = vmatpush.msra.mxu0 0.0
    %406 = vmatpush.msra.mxu0 0.0
    %407 = vmatpush.msra.mxu0 0.0
    %408 = vmatpush.msra.mxu0 0.0
    %409 = vmatpush.msra.mxu0 0.0
    %410 = vmatpush.msra.mxu0 0.0
    %411 = vmatpush.msra.mxu0 0.0
    %412 = vmatpush.msra.mxu0 0.0
    %413 = vmatpush.msra.mxu0 %v304
    %414 = vmatpush.msra.mxu0 %v303
    %415 = vmatmul.f32.gmra.mxu0 %v394
    %v416 = vpop.f32.mrf.mxu0
    %v417 = vadd.f32 %v388, %v416
    %418 = vmatmul.f32.gmra.mxu0 %v397
    %v419 = vpop.f32.mrf.mxu0
    %v420 = vadd.f32 %v391, %v419
    %421 = vdwg.mxu0
    %v422 = vmul.f32 %v153, %v58
    %v423 = vmul.f32 %v156, %v58
    %v425 = vsel %vm240, %v422, 0
    %v428 = vsel %vm240, %v423, 0
    %430 = vmatpush.xpose.msra.mxu0 0.0
    %431 = vmatpush.xpose.msra.mxu0 0.0
    %432 = vmatpush.xpose.msra.mxu0 0.0
    %433 = vmatpush.xpose.msra.mxu0 0.0
    %434 = vmatpush.xpose.msra.mxu0 0.0
    %435 = vmatpush.xpose.msra.mxu0 0.0
    %436 = vmatpush.xpose.msra.mxu0 0.0
    %437 = vmatpush.xpose.msra.mxu0 0.0
    %438 = vmatpush.xpose.msra.mxu0 0.0
    %439 = vmatpush.xpose.msra.mxu0 0.0
    %440 = vmatpush.xpose.msra.mxu0 0.0
    %441 = vmatpush.xpose.msra.mxu0 0.0
    %442 = vmatpush.xpose.msra.mxu0 0.0
    %443 = vmatpush.xpose.msra.mxu0 0.0
    %444 = vmatpush.xpose.msra.mxu0 %v251
    %445 = vmatpush.xpose.msra.mxu0 %v248
    %446 = vmatmul.f32.gmra.mxu0 %v425
    %v447 = vpop.f32.mrf.mxu0
    %v448 = vadd.f32 0.0, %v447
    %449 = vmatmul.f32.gmra.mxu0 %v428
    %v450 = vpop.f32.mrf.mxu0
    %v451 = vadd.f32 0.0, %v450
    %452 = vdwg.mxu0
    %v453 = vmul.f32 %v448, 0.35355338
    %v454 = vmul.f32 %v451, 0.35355338
    %v455 = vadd.f32 %v453, %v63
    %v456 = vadd.f32 %v454, %v64
    %v457 = vsel %vm280, %v455, -inf
    %458 = vmax.xlane.f32.xlu0 %v457
    %v459 = vpop.xlane.xlu0 %458
    %v460 = vsel %vm280, %v456, -inf
    %461 = vmax.xlane.f32.xlu0 %v460
    %v462 = vpop.xlane.xlu0 %461
    %v463 = vsub.f32 %v455, %v459
    %v464 = vsub.f32 %v456, %v462
    %v465 = vmul.f32 %v463, 1.442695
    %v466 = vpow.pop %v465
    %v467 = vmul.f32 %v464, 1.442695
    %v468 = vpow.pop %v467
    %v469 = vsel %vm280, %v466, 0.0
    %470 = vadd.xlane.f32.xlu0 %v469
    %v471 = vpop.xlane.xlu0 %470
    %v472 = vsel %vm280, %v468, 0.0
    %473 = vadd.xlane.f32.xlu0 %v472
    %v474 = vpop.xlane.xlu0 %473
    %v475 = vrcp.pop %v471
    %v476 = vrcp.pop %v474
    %v477 = vmul.f32 %v466, %v475
    %v478 = vmul.f32 %v468, %v476
    %v479 = vmul.f32 %v233, %v58
    %v480 = vmul.f32 %v236, %v58
    %v482 = vsel %vm280, %v477, 0
    %v485 = vsel %vm280, %v478, 0
    %487 = vmatpush.msra.mxu0 0.0
    %488 = vmatpush.msra.mxu0 0.0
    %489 = vmatpush.msra.mxu0 0.0
    %490 = vmatpush.msra.mxu0 0.0
    %491 = vmatpush.msra.mxu0 0.0
    %492 = vmatpush.msra.mxu0 0.0
    %493 = vmatpush.msra.mxu0 0.0
    %494 = vmatpush.msra.mxu0 0.0
    %495 = vmatpush.msra.mxu0 0.0
    %496 = vmatpush.msra.mxu0 0.0
    %497 = vmatpush.msra.mxu0 0.0
    %498 = vmatpush.msra.mxu0 0.0
    %499 = vmatpush.msra.mxu0 0.0
    %500 = vmatpush.msra.mxu0 0.0
    %501 = vmatpush.msra.mxu0 %v480
    %502 = vmatpush.msra.mxu0 %v479
    %503 = vmatmul.f32.gmra.mxu0 %v482
    %v504 = vpop.f32.mrf.mxu0
    %v505 = vadd.f32 0.0, %v504
    %506 = vmatmul.f32.gmra.mxu0 %v485
    %v507 = vpop.f32.mrf.mxu0
    %v508 = vadd.f32 0.0, %v507
    %509 = vdwg.mxu0
    %v510 = vadd.f32 %v417, %v505
    %v511 = vadd.f32 %v420, %v508
    %v512 = vmul.f32 %v153, %v62
    %v513 = vmul.f32 %v156, %v62
    %v515 = vsel %vm240, %v512, 0
    %v518 = vsel %vm240, %v513, 0
    %520 = vmatpush.xpose.msra.mxu0 0.0
    %521 = vmatpush.xpose.msra.mxu0 0.0
    %522 = vmatpush.xpose.msra.mxu0 0.0
    %523 = vmatpush.xpose.msra.mxu0 0.0
    %524 = vmatpush.xpose.msra.mxu0 0.0
    %525 = vmatpush.xpose.msra.mxu0 0.0
    %526 = vmatpush.xpose.msra.mxu0 0.0
    %527 = vmatpush.xpose.msra.mxu0 0.0
    %528 = vmatpush.xpose.msra.mxu0 0.0
    %529 = vmatpush.xpose.msra.mxu0 0.0
    %530 = vmatpush.xpose.msra.mxu0 0.0
    %531 = vmatpush.xpose.msra.mxu0 0.0
    %532 = vmatpush.xpose.msra.mxu0 0.0
    %533 = vmatpush.xpose.msra.mxu0 0.0
    %534 = vmatpush.xpose.msra.mxu0 %v251
    %535 = vmatpush.xpose.msra.mxu0 %v248
    %536 = vmatmul.f32.gmra.mxu0 %v515
    %v537 = vpop.f32.mrf.mxu0
    %v538 = vadd.f32 0.0, %v537
    %539 = vmatmul.f32.gmra.mxu0 %v518
    %v540 = vpop.f32.mrf.mxu0
    %v541 = vadd.f32 0.0, %v540
    %542 = vdwg.mxu0
    %v543 = vmul.f32 %v538, 0.35355338
    %v544 = vmul.f32 %v541, 0.35355338
    %v545 = vadd.f32 %v543, %v63
    %v546 = vadd.f32 %v544, %v64
    %v547 = vsel %vm280, %v545, -inf
    %548 = vmax.xlane.f32.xlu0 %v547
    %v549 = vpop.xlane.xlu0 %548
    %v550 = vsel %vm280, %v546, -inf
    %551 = vmax.xlane.f32.xlu0 %v550
    %v552 = vpop.xlane.xlu0 %551
    %v553 = vsub.f32 %v545, %v549
    %v554 = vsub.f32 %v546, %v552
    %v555 = vmul.f32 %v553, 1.442695
    %v556 = vpow.pop %v555
    %v557 = vmul.f32 %v554, 1.442695
    %v558 = vpow.pop %v557
    %v559 = vsel %vm280, %v556, 0.0
    %560 = vadd.xlane.f32.xlu0 %v559
    %v561 = vpop.xlane.xlu0 %560
    %v562 = vsel %vm280, %v558, 0.0
    %563 = vadd.xlane.f32.xlu0 %v562
    %v564 = vpop.xlane.xlu0 %563
    %v565 = vrcp.pop %v561
    %v566 = vrcp.pop %v564
    %v567 = vmul.f32 %v556, %v565
    %v568 = vmul.f32 %v558, %v566
    %v569 = vmul.f32 %v233, %v62
    %v570 = vmul.f32 %v236, %v62
    %v572 = vsel %vm280, %v567, 0
    %v575 = vsel %vm280, %v568, 0
    %577 = vmatpush.msra.mxu0 0.0
    %578 = vmatpush.msra.mxu0 0.0
    %579 = vmatpush.msra.mxu0 0.0
    %580 = vmatpush.msra.mxu0 0.0
    %581 = vmatpush.msra.mxu0 0.0
    %582 = vmatpush.msra.mxu0 0.0
    %583 = vmatpush.msra.mxu0 0.0
    %584 = vmatpush.msra.mxu0 0.0
    %585 = vmatpush.msra.mxu0 0.0
    %586 = vmatpush.msra.mxu0 0.0
    %587 = vmatpush.msra.mxu0 0.0
    %588 = vmatpush.msra.mxu0 0.0
    %589 = vmatpush.msra.mxu0 0.0
    %590 = vmatpush.msra.mxu0 0.0
    %591 = vmatpush.msra.mxu0 %v570
    %592 = vmatpush.msra.mxu0 %v569
    %593 = vmatmul.f32.gmra.mxu0 %v572
    %v594 = vpop.f32.mrf.mxu0
    %v595 = vadd.f32 0.0, %v594
    %596 = vmatmul.f32.gmra.mxu0 %v575
    %v597 = vpop.f32.mrf.mxu0
    %v598 = vadd.f32 0.0, %v597
    %599 = vdwg.mxu0
    %v600 = vadd.f32 %v510, %v595
    %v601 = vadd.f32 %v511, %v598
    %v602 = vld [vmem:[%s6] sm:$0xff]
    %v603 = vld [vmem:[%s6 + $0x8] sm:$0xff]
    %v604 = vld [vmem:[%s6 + $0x10] sm:$0xff]
    %v605 = vld [vmem:[%s6 + $0x18] sm:$0xff]
    %v606 = vperm.slane %v116, 3
    %v608 = vsel %vm240, %v600, 0
    %v611 = vsel %vm240, %v601, 0
    %613 = vmatpush.msra.mxu0 0.0
    %614 = vmatpush.msra.mxu0 0.0
    %615 = vmatpush.msra.mxu0 0.0
    %616 = vmatpush.msra.mxu0 0.0
    %617 = vmatpush.msra.mxu0 0.0
    %618 = vmatpush.msra.mxu0 0.0
    %619 = vmatpush.msra.mxu0 0.0
    %620 = vmatpush.msra.mxu0 0.0
    %621 = vmatpush.msra.mxu0 0.0
    %622 = vmatpush.msra.mxu0 0.0
    %623 = vmatpush.msra.mxu0 0.0
    %624 = vmatpush.msra.mxu0 0.0
    %625 = vmatpush.msra.mxu0 %v605
    %626 = vmatpush.msra.mxu0 %v604
    %627 = vmatpush.msra.mxu0 %v603
    %628 = vmatpush.msra.mxu0 %v602
    %629 = vmatmul.f32.gmra.mxu0 %v608
    %v630 = vpop.f32.mrf.mxu0
    %v631 = vadd.f32 %v606, %v630
    %632 = vmatmul.f32.gmra.mxu0 %v611
    %v633 = vpop.f32.mrf.mxu0
    %v634 = vadd.f32 %v606, %v633
    %635 = vdwg.mxu0
    %v636 = vadd.f32 %v114, %v631
    %v637 = vadd.f32 %v115, %v634
    %638 = vadd.xlane.f32.xlu0 %v636
    %v639 = vpop.xlane.xlu0 %638
    %640 = vadd.xlane.f32.xlu0 %v637
    %v641 = vpop.xlane.xlu0 %640
    %v642 = vmul.f32 %v639, 0.03125
    %v643 = vmul.f32 %v641, 0.03125
    %v644 = vsub.f32 %v636, %v642
    %v645 = vsub.f32 %v637, %v643
    %v646 = vmul.f32 %v644, %v43
    %v647 = vmul.f32 %v645, %v43
    %v648 = vmul.f32 %v646, %v646
    %v649 = vmul.f32 %v647, %v647
    %650 = vadd.xlane.f32.xlu0 %v648
    %v651 = vpop.xlane.xlu0 %650
    %652 = vadd.xlane.f32.xlu0 %v649
    %v653 = vpop.xlane.xlu0 %652
    %v654 = vmul.f32 %v651, 0.03125
    %v655 = vmul.f32 %v653, 0.03125
    %v656 = vadd.f32 %v654, 1e-12
    %v657 = vadd.f32 %v655, 1e-12
    %v658 = vrsqrt.pop %v656
    %v659 = vmul.f32 %v658, %v656
    %v660 = vmul.f32 %v659, %v658
    %v661 = vmul.f32 0.5, %v660
    %v662 = vsub.f32 1.5, %v661
    %v663 = vmul.f32 %v658, %v662
    %vm664 = vweird.f32 %v656
    %vm665 = vweird.f32 %v658
    %vm666 = vmor %vm664, %vm665
    %v667 = vsel %vm666, %v658, %v663
    %v668 = vrsqrt.pop %v657
    %v669 = vmul.f32 %v668, %v657
    %v670 = vmul.f32 %v669, %v668
    %v671 = vmul.f32 0.5, %v670
    %v672 = vsub.f32 1.5, %v671
    %v673 = vmul.f32 %v668, %v672
    %vm674 = vweird.f32 %v657
    %vm675 = vweird.f32 %v668
    %vm676 = vmor %vm674, %vm675
    %v677 = vsel %vm676, %v668, %v673
    %v678 = vmul.f32 %v646, %v667
    %v679 = vmul.f32 %v647, %v677
    %v680 = vperm.slane %v116, 4
    %v681 = vmul.f32 %v678, %v680
    %v682 = vmul.f32 %v679, %v680
    %v683 = vperm.slane %v116, 5
    %v684 = vadd.f32 %v681, %v683
    %v685 = vadd.f32 %v682, %v683
    %v686 = vld [vmem:[%s7] sm:$0xff]
    %v687 = vld [vmem:[%s7 + $0x8] sm:$0xff]
    %v688 = vld [vmem:[%s7 + $0x10] sm:$0xff]
    %v689 = vld [vmem:[%s7 + $0x18] sm:$0xff]
    %v690 = vld [vmem:[%s7 + $0x20] sm:$0xff]
    %v691 = vld [vmem:[%s7 + $0x28] sm:$0xff]
    %v692 = vld [vmem:[%s7 + $0x30] sm:$0xff]
    %v693 = vld [vmem:[%s7 + $0x38] sm:$0xff]
    %v694 = vld [vmem:[%s7 + $0x40] sm:$0xff]
    %v695 = vld [vmem:[%s7 + $0x48] sm:$0xff]
    %v696 = vld [vmem:[%s7 + $0x50] sm:$0xff]
    %v697 = vld [vmem:[%s7 + $0x58] sm:$0xff]
    %v698 = vld [vmem:[%s7 + $0x60] sm:$0xff]
    %v699 = vld [vmem:[%s7 + $0x68] sm:$0xff]
    %v700 = vld [vmem:[%s7 + $0x70] sm:$0xff]
    %v701 = vld [vmem:[%s7 + $0x78] sm:$0xff]
    %v702 = vperm.slane %v116, 6
    %703 = vmatpush.msra.mxu0 %v701
    %704 = vmatpush.msra.mxu0 %v700
    %705 = vmatpush.msra.mxu0 %v699
    %706 = vmatpush.msra.mxu0 %v698
    %707 = vmatpush.msra.mxu0 %v697
    %708 = vmatpush.msra.mxu0 %v696
    %709 = vmatpush.msra.mxu0 %v695
    %710 = vmatpush.msra.mxu0 %v694
    %711 = vmatpush.msra.mxu0 %v693
    %712 = vmatpush.msra.mxu0 %v692
    %713 = vmatpush.msra.mxu0 %v691
    %714 = vmatpush.msra.mxu0 %v690
    %715 = vmatpush.msra.mxu0 %v689
    %716 = vmatpush.msra.mxu0 %v688
    %717 = vmatpush.msra.mxu0 %v687
    %718 = vmatpush.msra.mxu0 %v686
    %719 = vmatmul.f32.gmra.mxu0 %v684
    %v720 = vpop.f32.mrf.mxu0
    %v721 = vadd.f32 %v702, %v720
    %722 = vmatmul.f32.gmra.mxu0 %v685
    %v723 = vpop.f32.mrf.mxu0
    %v724 = vadd.f32 %v702, %v723
    %725 = vdwg.mxu0
    %v726 = vmul.f32 %v721, 0.5
    %v727 = vmul.f32 %v724, 0.5
    %v728 = vmul.f32 %v721, 0.70710677
    %v729 = vmul.f32 %v724, 0.70710677
    %v730 = vmul.f32 %v728, %v728
    %v731 = vmin.f32 16.0, %v730
    %v732 = vmul.f32 %v731, 2.1237322e-06
    %v733 = vadd.f32 %v732, 0.00028619796
    %v734 = vmul.f32 %v731, %v733
    %v735 = vadd.f32 %v734, 0.0036580483
    %v736 = vmul.f32 %v731, %v735
    %v737 = vadd.f32 %v736, 0.05243302
    %v738 = vmul.f32 %v731, %v737
    %v739 = vadd.f32 %v738, 0.18741608
    %v740 = vmul.f32 %v731, %v739
    %v741 = vadd.f32 %v740, 1.1283791
    %v742 = vmul.f32 %v728, %v741
    %v743 = vmul.f32 %v731, 3.8918573e-05
    %v744 = vadd.f32 %v743, 0.001143296
    %v745 = vmul.f32 %v731, %v744
    %v746 = vadd.f32 %v745, 0.014752088
    %v747 = vmul.f32 %v731, %v746
    %v748 = vadd.f32 %v747, 0.112945676
    %v749 = vmul.f32 %v731, %v748
    %v750 = vadd.f32 %v749, 0.4994258
    %v751 = vmul.f32 %v731, %v750
    %v752 = vadd.f32 %v751, 1.0
    %v753 = vrcp.pop %v752
    %v754 = vmul.f32 %v752, %v753
    %v755 = vsub.f32 1.0, %v754
    %v756 = vmul.f32 %v753, %v755
    %v757 = vadd.f32 %v753, %v756
    %vm758 = vweird.f32 %v752
    %vm759 = vweird.f32 %v753
    %vm760 = vmor %vm758, %vm759
    %v761 = vsel %vm760, %v753, %v757
    %v762 = vand.u32 2147483647, %v752
    %vm763 = vcmp.eq.f32.partialorder %v762, 8.507059e+37
    %v764 = vand.u32 %v752, 2147483648
    %v765 = vor.u32 1.1754944e-38, %v764
    %v766 = vsel %vm763, %v765, %v761
    %v767 = vmul.f32 %v742, %v766
    %v768 = vmin.f32 %v767, 1.0
    %v769 = vmax.f32 %v768, -1.0
    %v770 = vmul.f32 %v729, %v729
    %v771 = vmin.f32 16.0, %v770
    %v772 = vmul.f32 %v771, 2.1237322e-06
    %v773 = vadd.f32 %v772, 0.00028619796
    %v774 = vmul.f32 %v771, %v773
    %v775 = vadd.f32 %v774, 0.0036580483
    %v776 = vmul.f32 %v771, %v775
    %v777 = vadd.f32 %v776, 0.05243302
    %v778 = vmul.f32 %v771, %v777
    %v779 = vadd.f32 %v778, 0.18741608
    %v780 = vmul.f32 %v771, %v779
    %v781 = vadd.f32 %v780, 1.1283791
    %v782 = vmul.f32 %v729, %v781
    %v783 = vmul.f32 %v771, 3.8918573e-05
    %v784 = vadd.f32 %v783, 0.001143296
    %v785 = vmul.f32 %v771, %v784
    %v786 = vadd.f32 %v785, 0.014752088
    %v787 = vmul.f32 %v771, %v786
    %v788 = vadd.f32 %v787, 0.112945676
    %v789 = vmul.f32 %v771, %v788
    %v790 = vadd.f32 %v789, 0.4994258
    %v791 = vmul.f32 %v771, %v790
    %v792 = vadd.f32 %v791, 1.0
    %v793 = vrcp.pop %v792
    %v794 = vmul.f32 %v792, %v793
    %v795 = vsub.f32 1.0, %v794
    %v796 = vmul.f32 %v793, %v795
    %v797 = vadd.f32 %v793, %v796
    %vm798 = vweird.f32 %v792
    %vm799 = vweird.f32 %v793
    %vm800 = vmor %vm798, %vm799
    %v801 = vsel %vm800, %v793, %v797
    %v802 = vand.u32 2147483647, %v792
    %vm803 = vcmp.eq.f32.partialorder %v802, 8.507059e+37
    %v804 = vand.u32 %v792, 2147483648
    %v805 = vor.u32 1.1754944e-38, %v804
    %v806 = vsel %vm803, %v805, %v801
    %v807 = vmul.f32 %v782, %v806
    %v808 = vmin.f32 %v807, 1.0
    %v809 = vmax.f32 %v808, -1.0
    %v810 = vadd.f32 %v769, 1.0
    %v811 = vadd.f32 %v809, 1.0
    %v812 = vmul.f32 %v726, %v810
    %v813 = vmul.f32 %v727, %v811
    %v814 = vld [vmem:[%s8] sm:$0xff]
    %v815 = vld [vmem:[%s8 + $0x8] sm:$0xff]
    %v816 = vld [vmem:[%s8 + $0x10] sm:$0xff]
    %v817 = vld [vmem:[%s8 + $0x18] sm:$0xff]
    %v818 = vld [vmem:[%s8 + $0x20] sm:$0xff]
    %v819 = vld [vmem:[%s8 + $0x28] sm:$0xff]
    %v820 = vld [vmem:[%s8 + $0x30] sm:$0xff]
    %v821 = vld [vmem:[%s8 + $0x38] sm:$0xff]
    %v822 = vperm.slane %v116, 7
    %vm823 = vcmask 523264
    %v825 = vsel %vm823, %v812, 0
    %v828 = vsel %vm823, %v813, 0
    %830 = vmatpush.msra.mxu0 0.0
    %831 = vmatpush.msra.mxu0 0.0
    %832 = vmatpush.msra.mxu0 0.0
    %833 = vmatpush.msra.mxu0 0.0
    %834 = vmatpush.msra.mxu0 0.0
    %835 = vmatpush.msra.mxu0 0.0
    %836 = vmatpush.msra.mxu0 0.0
    %837 = vmatpush.msra.mxu0 0.0
    %838 = vmatpush.msra.mxu0 %v821
    %839 = vmatpush.msra.mxu0 %v820
    %840 = vmatpush.msra.mxu0 %v819
    %841 = vmatpush.msra.mxu0 %v818
    %842 = vmatpush.msra.mxu0 %v817
    %843 = vmatpush.msra.mxu0 %v816
    %844 = vmatpush.msra.mxu0 %v815
    %845 = vmatpush.msra.mxu0 %v814
    %846 = vmatmul.f32.gmra.mxu0 %v825
    %v847 = vpop.f32.mrf.mxu0
    %v848 = vadd.f32 %v822, %v847
    %849 = vmatmul.f32.gmra.mxu0 %v828
    %v850 = vpop.f32.mrf.mxu0
    %v851 = vadd.f32 %v822, %v850
    %852 = vdwg.mxu0
    %v853 = vadd.f32 %v684, %v848
    %v854 = vadd.f32 %v685, %v851
    %855 = vadd.xlane.f32.xlu0 %v853
    %v856 = vpop.xlane.xlu0 %855
    %857 = vadd.xlane.f32.xlu0 %v854
    %v858 = vpop.xlane.xlu0 %857
    %v859 = vmul.f32 %v856, 0.03125
    %v860 = vmul.f32 %v858, 0.03125
    %v861 = vsub.f32 %v853, %v859
    %v862 = vsub.f32 %v854, %v860
    %v863 = vmul.f32 %v861, %v43
    %v864 = vmul.f32 %v862, %v43
    %v865 = vmul.f32 %v863, %v863
    %v866 = vmul.f32 %v864, %v864
    %867 = vadd.xlane.f32.xlu0 %v865
    %v868 = vpop.xlane.xlu0 %867
    %869 = vadd.xlane.f32.xlu0 %v866
    %v870 = vpop.xlane.xlu0 %869
    %v871 = vmul.f32 %v868, 0.03125
    %v872 = vmul.f32 %v870, 0.03125
    %v873 = vadd.f32 %v871, 1e-12
    %v874 = vadd.f32 %v872, 1e-12
    %v875 = vrsqrt.pop %v873
    %v876 = vmul.f32 %v875, %v873
    %v877 = vmul.f32 %v876, %v875
    %v878 = vmul.f32 0.5, %v877
    %v879 = vsub.f32 1.5, %v878
    %v880 = vmul.f32 %v875, %v879
    %vm881 = vweird.f32 %v873
    %vm882 = vweird.f32 %v875
    %vm883 = vmor %vm881, %vm882
    %v884 = vsel %vm883, %v875, %v880
    %v885 = vrsqrt.pop %v874
    %v886 = vmul.f32 %v885, %v874
    %v887 = vmul.f32 %v886, %v885
    %v888 = vmul.f32 0.5, %v887
    %v889 = vsub.f32 1.5, %v888
    %v890 = vmul.f32 %v885, %v889
    %vm891 = vweird.f32 %v874
    %vm892 = vweird.f32 %v885
    %vm893 = vmor %vm891, %vm892
    %v894 = vsel %vm893, %v885, %v890
    %v895 = vmul.f32 %v863, %v884
    %v896 = vmul.f32 %v864, %v894
    %v897 = vperm.slane %v117, 0
    %v898 = vmul.f32 %v895, %v897
    %v899 = vmul.f32 %v896, %v897
    %v900 = vperm.slane %v117, 1
    %v901 = vadd.f32 %v898, %v900
    %v902 = vadd.f32 %v899, %v900
    %s903 = scalar_lea.vmem %s9, 16
    %v904 = vld [vmem:[%s903] sm:$0xff]
    %v905 = vld [vmem:[%s903 + $0x8] sm:$0xff]
    %s906 = scalar_lea.vmem %s3, 128
    %v907 = vld [vmem:[%s906] sm:$0xff]
    %v908 = vld [vmem:[%s906 + $0x8] sm:$0xff]
    %v909 = vld [vmem:[%s906 + $0x10] sm:$0xff]
    %v910 = vld [vmem:[%s906 + $0x18] sm:$0xff]
    %v911 = vld [vmem:[%s906 + $0x20] sm:$0xff]
    %v912 = vld [vmem:[%s906 + $0x28] sm:$0xff]
    %v913 = vld [vmem:[%s906 + $0x30] sm:$0xff]
    %v914 = vld [vmem:[%s906 + $0x38] sm:$0xff]
    %v915 = vld [vmem:[%s906 + $0x40] sm:$0xff]
    %v916 = vld [vmem:[%s906 + $0x48] sm:$0xff]
    %v917 = vld [vmem:[%s906 + $0x50] sm:$0xff]
    %v918 = vld [vmem:[%s906 + $0x58] sm:$0xff]
    %v919 = vld [vmem:[%s906 + $0x60] sm:$0xff]
    %v920 = vld [vmem:[%s906 + $0x68] sm:$0xff]
    %v921 = vld [vmem:[%s906 + $0x70] sm:$0xff]
    %v922 = vld [vmem:[%s906 + $0x78] sm:$0xff]
    %v923 = vperm.slane %v904, 0
    %924 = vmatpush.msra.mxu0 %v922
    %925 = vmatpush.msra.mxu0 %v921
    %926 = vmatpush.msra.mxu0 %v920
    %927 = vmatpush.msra.mxu0 %v919
    %928 = vmatpush.msra.mxu0 %v918
    %929 = vmatpush.msra.mxu0 %v917
    %930 = vmatpush.msra.mxu0 %v916
    %931 = vmatpush.msra.mxu0 %v915
    %932 = vmatpush.msra.mxu0 %v914
    %933 = vmatpush.msra.mxu0 %v913
    %934 = vmatpush.msra.mxu0 %v912
    %935 = vmatpush.msra.mxu0 %v911
    %936 = vmatpush.msra.mxu0 %v910
    %937 = vmatpush.msra.mxu0 %v909
    %938 = vmatpush.msra.mxu0 %v908
    %939 = vmatpush.msra.mxu0 %v907
    %940 = vmatmul.f32.gmra.mxu0 %v901
    %v941 = vpop.f32.mrf.mxu0
    %v942 = vadd.f32 %v923, %v941
    %943 = vmatmul.f32.gmra.mxu0 %v902
    %v944 = vpop.f32.mrf.mxu0
    %v945 = vadd.f32 %v923, %v944
    %946 = vdwg.mxu0
    %s947 = scalar_lea.vmem %s4, 128
    %v948 = vld [vmem:[%s947] sm:$0xff]
    %v949 = vld [vmem:[%s947 + $0x8] sm:$0xff]
    %v950 = vld [vmem:[%s947 + $0x10] sm:$0xff]
    %v951 = vld [vmem:[%s947 + $0x18] sm:$0xff]
    %v952 = vld [vmem:[%s947 + $0x20] sm:$0xff]
    %v953 = vld [vmem:[%s947 + $0x28] sm:$0xff]
    %v954 = vld [vmem:[%s947 + $0x30] sm:$0xff]
    %v955 = vld [vmem:[%s947 + $0x38] sm:$0xff]
    %v956 = vld [vmem:[%s947 + $0x40] sm:$0xff]
    %v957 = vld [vmem:[%s947 + $0x48] sm:$0xff]
    %v958 = vld [vmem:[%s947 + $0x50] sm:$0xff]
    %v959 = vld [vmem:[%s947 + $0x58] sm:$0xff]
    %v960 = vld [vmem:[%s947 + $0x60] sm:$0xff]
    %v961 = vld [vmem:[%s947 + $0x68] sm:$0xff]
    %v962 = vld [vmem:[%s947 + $0x70] sm:$0xff]
    %v963 = vld [vmem:[%s947 + $0x78] sm:$0xff]
    %v964 = vperm.slane %v904, 1
    %965 = vmatpush.msra.mxu0 %v963
    %966 = vmatpush.msra.mxu0 %v962
    %967 = vmatpush.msra.mxu0 %v961
    %968 = vmatpush.msra.mxu0 %v960
    %969 = vmatpush.msra.mxu0 %v959
    %970 = vmatpush.msra.mxu0 %v958
    %971 = vmatpush.msra.mxu0 %v957
    %972 = vmatpush.msra.mxu0 %v956
    %973 = vmatpush.msra.mxu0 %v955
    %974 = vmatpush.msra.mxu0 %v954
    %975 = vmatpush.msra.mxu0 %v953
    %976 = vmatpush.msra.mxu0 %v952
    %977 = vmatpush.msra.mxu0 %v951
    %978 = vmatpush.msra.mxu0 %v950
    %979 = vmatpush.msra.mxu0 %v949
    %980 = vmatpush.msra.mxu0 %v948
    %981 = vmatmul.f32.gmra.mxu0 %v901
    %v982 = vpop.f32.mrf.mxu0
    %v983 = vadd.f32 %v964, %v982
    %984 = vmatmul.f32.gmra.mxu0 %v902
    %v985 = vpop.f32.mrf.mxu0
    %v986 = vadd.f32 %v964, %v985
    %987 = vdwg.mxu0
    %s988 = scalar_lea.vmem %s5, 128
    %v989 = vld [vmem:[%s988] sm:$0xff]
    %v990 = vld [vmem:[%s988 + $0x8] sm:$0xff]
    %v991 = vld [vmem:[%s988 + $0x10] sm:$0xff]
    %v992 = vld [vmem:[%s988 + $0x18] sm:$0xff]
    %v993 = vld [vmem:[%s988 + $0x20] sm:$0xff]
    %v994 = vld [vmem:[%s988 + $0x28] sm:$0xff]
    %v995 = vld [vmem:[%s988 + $0x30] sm:$0xff]
    %v996 = vld [vmem:[%s988 + $0x38] sm:$0xff]
    %v997 = vld [vmem:[%s988 + $0x40] sm:$0xff]
    %v998 = vld [vmem:[%s988 + $0x48] sm:$0xff]
    %v999 = vld [vmem:[%s988 + $0x50] sm:$0xff]
    %v1000 = vld [vmem:[%s988 + $0x58] sm:$0xff]
    %v1001 = vld [vmem:[%s988 + $0x60] sm:$0xff]
    %v1002 = vld [vmem:[%s988 + $0x68] sm:$0xff]
    %v1003 = vld [vmem:[%s988 + $0x70] sm:$0xff]
    %v1004 = vld [vmem:[%s988 + $0x78] sm:$0xff]
    %v1005 = vperm.slane %v904, 2
    %1006 = vmatpush.msra.mxu0 %v1004
    %1007 = vmatpush.msra.mxu0 %v1003
    %1008 = vmatpush.msra.mxu0 %v1002
    %1009 = vmatpush.msra.mxu0 %v1001
    %1010 = vmatpush.msra.mxu0 %v1000
    %1011 = vmatpush.msra.mxu0 %v999
    %1012 = vmatpush.msra.mxu0 %v998
    %1013 = vmatpush.msra.mxu0 %v997
    %1014 = vmatpush.msra.mxu0 %v996
    %1015 = vmatpush.msra.mxu0 %v995
    %1016 = vmatpush.msra.mxu0 %v994
    %1017 = vmatpush.msra.mxu0 %v993
    %1018 = vmatpush.msra.mxu0 %v992
    %1019 = vmatpush.msra.mxu0 %v991
    %1020 = vmatpush.msra.mxu0 %v990
    %1021 = vmatpush.msra.mxu0 %v989
    %1022 = vmatmul.f32.gmra.mxu0 %v901
    %v1023 = vpop.f32.mrf.mxu0
    %v1024 = vadd.f32 %v1005, %v1023
    %1025 = vmatmul.f32.gmra.mxu0 %v902
    %v1026 = vpop.f32.mrf.mxu0
    %v1027 = vadd.f32 %v1005, %v1026
    %1028 = vdwg.mxu0
    %v1029 = vmul.f32 %v942, %v48
    %v1030 = vmul.f32 %v945, %v48
    %v1032 = vsel %vm240, %v1029, 0
    %v1035 = vsel %vm240, %v1030, 0
    %v1038 = vsel %vm240, %v983, 0
    %v1041 = vsel %vm240, %v986, 0
    %1043 = vmatpush.xpose.msra.mxu0 0.0
    %1044 = vmatpush.xpose.msra.mxu0 0.0
    %1045 = vmatpush.xpose.msra.mxu0 0.0
    %1046 = vmatpush.xpose.msra.mxu0 0.0
    %1047 = vmatpush.xpose.msra.mxu0 0.0
    %1048 = vmatpush.xpose.msra.mxu0 0.0
    %1049 = vmatpush.xpose.msra.mxu0 0.0
    %1050 = vmatpush.xpose.msra.mxu0 0.0
    %1051 = vmatpush.xpose.msra.mxu0 0.0
    %1052 = vmatpush.xpose.msra.mxu0 0.0
    %1053 = vmatpush.xpose.msra.mxu0 0.0
    %1054 = vmatpush.xpose.msra.mxu0 0.0
    %1055 = vmatpush.xpose.msra.mxu0 0.0
    %1056 = vmatpush.xpose.msra.mxu0 0.0
    %1057 = vmatpush.xpose.msra.mxu0 %v1041
    %1058 = vmatpush.xpose.msra.mxu0 %v1038
    %1059 = vmatmul.f32.gmra.mxu0 %v1032
    %v1060 = vpop.f32.mrf.mxu0
    %v1061 = vadd.f32 0.0, %v1060
    %1062 = vmatmul.f32.gmra.mxu0 %v1035
    %v1063 = vpop.f32.mrf.mxu0
    %v1064 = vadd.f32 0.0, %v1063
    %1065 = vdwg.mxu0
    %v1066 = vmul.f32 %v1061, 0.35355338
    %v1067 = vmul.f32 %v1064, 0.35355338
    %v1068 = vadd.f32 %v1066, %v63
    %v1069 = vadd.f32 %v1067, %v64
    %v1070 = vsel %vm280, %v1068, -inf
    %1071 = vmax.xlane.f32.xlu0 %v1070
    %v1072 = vpop.xlane.xlu0 %1071
    %v1073 = vsel %vm280, %v1069, -inf
    %1074 = vmax.xlane.f32.xlu0 %v1073
    %v1075 = vpop.xlane.xlu0 %1074
    %v1076 = vsub.f32 %v1068, %v1072
    %v1077 = vsub.f32 %v1069, %v1075
    %v1078 = vmul.f32 %v1076, 1.442695
    %v1079 = vpow.pop %v1078
    %v1080 = vmul.f32 %v1077, 1.442695
    %v1081 = vpow.pop %v1080
    %v1082 = vsel %vm280, %v1079, 0.0
    %1083 = vadd.xlane.f32.xlu0 %v1082
    %v1084 = vpop.xlane.xlu0 %1083
    %v1085 = vsel %vm280, %v1081, 0.0
    %1086 = vadd.xlane.f32.xlu0 %v1085
    %v1087 = vpop.xlane.xlu0 %1086
    %v1088 = vrcp.pop %v1084
    %v1089 = vrcp.pop %v1087
    %v1090 = vmul.f32 %v1079, %v1088
    %v1091 = vmul.f32 %v1081, %v1089
    %v1092 = vmul.f32 %v1024, %v48
    %v1093 = vmul.f32 %v1027, %v48
    %v1094 = vmul.f32 %v942, %v53
    %v1095 = vmul.f32 %v945, %v53
    %v1097 = vsel %vm240, %v1094, 0
    %v1100 = vsel %vm240, %v1095, 0
    %1102 = vmatpush.xpose.msra.mxu0 0.0
    %1103 = vmatpush.xpose.msra.mxu0 0.0
    %1104 = vmatpush.xpose.msra.mxu0 0.0
    %1105 = vmatpush.xpose.msra.mxu0 0.0
    %1106 = vmatpush.xpose.msra.mxu0 0.0
    %1107 = vmatpush.xpose.msra.mxu0 0.0
    %1108 = vmatpush.xpose.msra.mxu0 0.0
    %1109 = vmatpush.xpose.msra.mxu0 0.0
    %1110 = vmatpush.xpose.msra.mxu0 0.0
    %1111 = vmatpush.xpose.msra.mxu0 0.0
    %1112 = vmatpush.xpose.msra.mxu0 0.0
    %1113 = vmatpush.xpose.msra.mxu0 0.0
    %1114 = vmatpush.xpose.msra.mxu0 0.0
    %1115 = vmatpush.xpose.msra.mxu0 0.0
    %1116 = vmatpush.xpose.msra.mxu0 %v1041
    %1117 = vmatpush.xpose.msra.mxu0 %v1038
    %1118 = vmatmul.f32.gmra.mxu0 %v1097
    %v1119 = vpop.f32.mrf.mxu0
    %v1120 = vadd.f32 0.0, %v1119
    %1121 = vmatmul.f32.gmra.mxu0 %v1100
    %v1122 = vpop.f32.mrf.mxu0
    %v1123 = vadd.f32 0.0, %v1122
    %1124 = vdwg.mxu0
    %v1125 = vmul.f32 %v1120, 0.35355338
    %v1126 = vmul.f32 %v1123, 0.35355338
    %v1127 = vadd.f32 %v1125, %v63
    %v1128 = vadd.f32 %v1126, %v64
    %v1129 = vsel %vm280, %v1127, -inf
    %1130 = vmax.xlane.f32.xlu0 %v1129
    %v1131 = vpop.xlane.xlu0 %1130
    %v1132 = vsel %vm280, %v1128, -inf
    %1133 = vmax.xlane.f32.xlu0 %v1132
    %v1134 = vpop.xlane.xlu0 %1133
    %v1135 = vsub.f32 %v1127, %v1131
    %v1136 = vsub.f32 %v1128, %v1134
    %v1137 = vmul.f32 %v1135, 1.442695
    %v1138 = vpow.pop %v1137
    %v1139 = vmul.f32 %v1136, 1.442695
    %v1140 = vpow.pop %v1139
    %v1141 = vsel %vm280, %v1138, 0.0
    %1142 = vadd.xlane.f32.xlu0 %v1141
    %v1143 = vpop.xlane.xlu0 %1142
    %v1144 = vsel %vm280, %v1140, 0.0
    %1145 = vadd.xlane.f32.xlu0 %v1144
    %v1146 = vpop.xlane.xlu0 %1145
    %v1147 = vrcp.pop %v1143
    %v1148 = vrcp.pop %v1146
    %v1149 = vmul.f32 %v1138, %v1147
    %v1150 = vmul.f32 %v1140, %v1148
    %v1151 = vmul.f32 %v1024, %v53
    %v1152 = vmul.f32 %v1027, %v53
    %v1154 = vsel %vm280, %v1149, 0
    %v1157 = vsel %vm280, %v1150, 0
    %1159 = vmatpush.msra.mxu0 0.0
    %1160 = vmatpush.msra.mxu0 0.0
    %1161 = vmatpush.msra.mxu0 0.0
    %1162 = vmatpush.msra.mxu0 0.0
    %1163 = vmatpush.msra.mxu0 0.0
    %1164 = vmatpush.msra.mxu0 0.0
    %1165 = vmatpush.msra.mxu0 0.0
    %1166 = vmatpush.msra.mxu0 0.0
    %1167 = vmatpush.msra.mxu0 0.0
    %1168 = vmatpush.msra.mxu0 0.0
    %1169 = vmatpush.msra.mxu0 0.0
    %1170 = vmatpush.msra.mxu0 0.0
    %1171 = vmatpush.msra.mxu0 0.0
    %1172 = vmatpush.msra.mxu0 0.0
    %1173 = vmatpush.msra.mxu0 %v1152
    %1174 = vmatpush.msra.mxu0 %v1151
    %1175 = vmatmul.f32.gmra.mxu0 %v1154
    %v1176 = vpop.f32.mrf.mxu0
    %v1177 = vadd.f32 0.0, %v1176
    %1178 = vmatmul.f32.gmra.mxu0 %v1157
    %v1179 = vpop.f32.mrf.mxu0
    %v1180 = vadd.f32 0.0, %v1179
    %1181 = vdwg.mxu0
    %v1183 = vsel %vm280, %v1090, 0
    %v1186 = vsel %vm280, %v1091, 0
    %1188 = vmatpush.msra.mxu0 0.0
    %1189 = vmatpush.msra.mxu0 0.0
    %1190 = vmatpush.msra.mxu0 0.0
    %1191 = vmatpush.msra.mxu0 0.0
    %1192 = vmatpush.msra.mxu0 0.0
    %1193 = vmatpush.msra.mxu0 0.0
    %1194 = vmatpush.msra.mxu0 0.0
    %1195 = vmatpush.msra.mxu0 0.0
    %1196 = vmatpush.msra.mxu0 0.0
    %1197 = vmatpush.msra.mxu0 0.0
    %1198 = vmatpush.msra.mxu0 0.0
    %1199 = vmatpush.msra.mxu0 0.0
    %1200 = vmatpush.msra.mxu0 0.0
    %1201 = vmatpush.msra.mxu0 0.0
    %1202 = vmatpush.msra.mxu0 %v1093
    %1203 = vmatpush.msra.mxu0 %v1092
    %1204 = vmatmul.f32.gmra.mxu0 %v1183
    %v1205 = vpop.f32.mrf.mxu0
    %v1206 = vadd.f32 %v1177, %v1205
    %1207 = vmatmul.f32.gmra.mxu0 %v1186
    %v1208 = vpop.f32.mrf.mxu0
    %v1209 = vadd.f32 %v1180, %v1208
    %1210 = vdwg.mxu0
    %v1211 = vmul.f32 %v942, %v58
    %v1212 = vmul.f32 %v945, %v58
    %v1214 = vsel %vm240, %v1211, 0
    %v1217 = vsel %vm240, %v1212, 0
    %1219 = vmatpush.xpose.msra.mxu0 0.0
    %1220 = vmatpush.xpose.msra.mxu0 0.0
    %1221 = vmatpush.xpose.msra.mxu0 0.0
    %1222 = vmatpush.xpose.msra.mxu0 0.0
    %1223 = vmatpush.xpose.msra.mxu0 0.0
    %1224 = vmatpush.xpose.msra.mxu0 0.0
    %1225 = vmatpush.xpose.msra.mxu0 0.0
    %1226 = vmatpush.xpose.msra.mxu0 0.0
    %1227 = vmatpush.xpose.msra.mxu0 0.0
    %1228 = vmatpush.xpose.msra.mxu0 0.0
    %1229 = vmatpush.xpose.msra.mxu0 0.0
    %1230 = vmatpush.xpose.msra.mxu0 0.0
    %1231 = vmatpush.xpose.msra.mxu0 0.0
    %1232 = vmatpush.xpose.msra.mxu0 0.0
    %1233 = vmatpush.xpose.msra.mxu0 %v1041
    %1234 = vmatpush.xpose.msra.mxu0 %v1038
    %1235 = vmatmul.f32.gmra.mxu0 %v1214
    %v1236 = vpop.f32.mrf.mxu0
    %v1237 = vadd.f32 0.0, %v1236
    %1238 = vmatmul.f32.gmra.mxu0 %v1217
    %v1239 = vpop.f32.mrf.mxu0
    %v1240 = vadd.f32 0.0, %v1239
    %1241 = vdwg.mxu0
    %v1242 = vmul.f32 %v1237, 0.35355338
    %v1243 = vmul.f32 %v1240, 0.35355338
    %v1244 = vadd.f32 %v1242, %v63
    %v1245 = vadd.f32 %v1243, %v64
    %v1246 = vsel %vm280, %v1244, -inf
    %1247 = vmax.xlane.f32.xlu0 %v1246
    %v1248 = vpop.xlane.xlu0 %1247
    %v1249 = vsel %vm280, %v1245, -inf
    %1250 = vmax.xlane.f32.xlu0 %v1249
    %v1251 = vpop.xlane.xlu0 %1250
    %v1252 = vsub.f32 %v1244, %v1248
    %v1253 = vsub.f32 %v1245, %v1251
    %v1254 = vmul.f32 %v1252, 1.442695
    %v1255 = vpow.pop %v1254
    %v1256 = vmul.f32 %v1253, 1.442695
    %v1257 = vpow.pop %v1256
    %v1258 = vsel %vm280, %v1255, 0.0
    %1259 = vadd.xlane.f32.xlu0 %v1258
    %v1260 = vpop.xlane.xlu0 %1259
    %v1261 = vsel %vm280, %v1257, 0.0
    %1262 = vadd.xlane.f32.xlu0 %v1261
    %v1263 = vpop.xlane.xlu0 %1262
    %v1264 = vrcp.pop %v1260
    %v1265 = vrcp.pop %v1263
    %v1266 = vmul.f32 %v1255, %v1264
    %v1267 = vmul.f32 %v1257, %v1265
    %v1268 = vmul.f32 %v1024, %v58
    %v1269 = vmul.f32 %v1027, %v58
    %v1271 = vsel %vm280, %v1266, 0
    %v1274 = vsel %vm280, %v1267, 0
    %1276 = vmatpush.msra.mxu0 0.0
    %1277 = vmatpush.msra.mxu0 0.0
    %1278 = vmatpush.msra.mxu0 0.0
    %1279 = vmatpush.msra.mxu0 0.0
    %1280 = vmatpush.msra.mxu0 0.0
    %1281 = vmatpush.msra.mxu0 0.0
    %1282 = vmatpush.msra.mxu0 0.0
    %1283 = vmatpush.msra.mxu0 0.0
    %1284 = vmatpush.msra.mxu0 0.0
    %1285 = vmatpush.msra.mxu0 0.0
    %1286 = vmatpush.msra.mxu0 0.0
    %1287 = vmatpush.msra.mxu0 0.0
    %1288 = vmatpush.msra.mxu0 0.0
    %1289 = vmatpush.msra.mxu0 0.0
    %1290 = vmatpush.msra.mxu0 %v1269
    %1291 = vmatpush.msra.mxu0 %v1268
    %1292 = vmatmul.f32.gmra.mxu0 %v1271
    %v1293 = vpop.f32.mrf.mxu0
    %v1294 = vadd.f32 0.0, %v1293
    %1295 = vmatmul.f32.gmra.mxu0 %v1274
    %v1296 = vpop.f32.mrf.mxu0
    %v1297 = vadd.f32 0.0, %v1296
    %1298 = vdwg.mxu0
    %v1299 = vadd.f32 %v1206, %v1294
    %v1300 = vadd.f32 %v1209, %v1297
    %v1301 = vmul.f32 %v942, %v62
    %v1302 = vmul.f32 %v945, %v62
    %v1304 = vsel %vm240, %v1301, 0
    %v1307 = vsel %vm240, %v1302, 0
    %1309 = vmatpush.xpose.msra.mxu0 0.0
    %1310 = vmatpush.xpose.msra.mxu0 0.0
    %1311 = vmatpush.xpose.msra.mxu0 0.0
    %1312 = vmatpush.xpose.msra.mxu0 0.0
    %1313 = vmatpush.xpose.msra.mxu0 0.0
    %1314 = vmatpush.xpose.msra.mxu0 0.0
    %1315 = vmatpush.xpose.msra.mxu0 0.0
    %1316 = vmatpush.xpose.msra.mxu0 0.0
    %1317 = vmatpush.xpose.msra.mxu0 0.0
    %1318 = vmatpush.xpose.msra.mxu0 0.0
    %1319 = vmatpush.xpose.msra.mxu0 0.0
    %1320 = vmatpush.xpose.msra.mxu0 0.0
    %1321 = vmatpush.xpose.msra.mxu0 0.0
    %1322 = vmatpush.xpose.msra.mxu0 0.0
    %1323 = vmatpush.xpose.msra.mxu0 %v1041
    %1324 = vmatpush.xpose.msra.mxu0 %v1038
    %1325 = vmatmul.f32.gmra.mxu0 %v1304
    %v1326 = vpop.f32.mrf.mxu0
    %v1327 = vadd.f32 0.0, %v1326
    %1328 = vmatmul.f32.gmra.mxu0 %v1307
    %v1329 = vpop.f32.mrf.mxu0
    %v1330 = vadd.f32 0.0, %v1329
    %1331 = vdwg.mxu0
    %v1332 = vmul.f32 %v1327, 0.35355338
    %v1333 = vmul.f32 %v1330, 0.35355338
    %v1334 = vadd.f32 %v1332, %v63
    %v1335 = vadd.f32 %v1333, %v64
    %v1336 = vsel %vm280, %v1334, -inf
    %1337 = vmax.xlane.f32.xlu0 %v1336
    %v1338 = vpop.xlane.xlu0 %1337
    %v1339 = vsel %vm280, %v1335, -inf
    %1340 = vmax.xlane.f32.xlu0 %v1339
    %v1341 = vpop.xlane.xlu0 %1340
    %v1342 = vsub.f32 %v1334, %v1338
    %v1343 = vsub.f32 %v1335, %v1341
    %v1344 = vmul.f32 %v1342, 1.442695
    %v1345 = vpow.pop %v1344
    %v1346 = vmul.f32 %v1343, 1.442695
    %v1347 = vpow.pop %v1346
    %v1348 = vsel %vm280, %v1345, 0.0
    %1349 = vadd.xlane.f32.xlu0 %v1348
    %v1350 = vpop.xlane.xlu0 %1349
    %v1351 = vsel %vm280, %v1347, 0.0
    %1352 = vadd.xlane.f32.xlu0 %v1351
    %v1353 = vpop.xlane.xlu0 %1352
    %v1354 = vrcp.pop %v1350
    %v1355 = vrcp.pop %v1353
    %v1356 = vmul.f32 %v1345, %v1354
    %v1357 = vmul.f32 %v1347, %v1355
    %v1358 = vmul.f32 %v1024, %v62
    %v1359 = vmul.f32 %v1027, %v62
    %v1361 = vsel %vm280, %v1356, 0
    %v1364 = vsel %vm280, %v1357, 0
    %1366 = vmatpush.msra.mxu0 0.0
    %1367 = vmatpush.msra.mxu0 0.0
    %1368 = vmatpush.msra.mxu0 0.0
    %1369 = vmatpush.msra.mxu0 0.0
    %1370 = vmatpush.msra.mxu0 0.0
    %1371 = vmatpush.msra.mxu0 0.0
    %1372 = vmatpush.msra.mxu0 0.0
    %1373 = vmatpush.msra.mxu0 0.0
    %1374 = vmatpush.msra.mxu0 0.0
    %1375 = vmatpush.msra.mxu0 0.0
    %1376 = vmatpush.msra.mxu0 0.0
    %1377 = vmatpush.msra.mxu0 0.0
    %1378 = vmatpush.msra.mxu0 0.0
    %1379 = vmatpush.msra.mxu0 0.0
    %1380 = vmatpush.msra.mxu0 %v1359
    %1381 = vmatpush.msra.mxu0 %v1358
    %1382 = vmatmul.f32.gmra.mxu0 %v1361
    %v1383 = vpop.f32.mrf.mxu0
    %v1384 = vadd.f32 0.0, %v1383
    %1385 = vmatmul.f32.gmra.mxu0 %v1364
    %v1386 = vpop.f32.mrf.mxu0
    %v1387 = vadd.f32 0.0, %v1386
    %1388 = vdwg.mxu0
    %v1389 = vadd.f32 %v1299, %v1384
    %v1390 = vadd.f32 %v1300, %v1387
    %s1391 = scalar_lea.vmem %s6, 32
    %v1392 = vld [vmem:[%s1391] sm:$0xff]
    %v1393 = vld [vmem:[%s1391 + $0x8] sm:$0xff]
    %v1394 = vld [vmem:[%s1391 + $0x10] sm:$0xff]
    %v1395 = vld [vmem:[%s1391 + $0x18] sm:$0xff]
    %v1396 = vperm.slane %v904, 3
    %v1398 = vsel %vm240, %v1389, 0
    %v1401 = vsel %vm240, %v1390, 0
    %1403 = vmatpush.msra.mxu0 0.0
    %1404 = vmatpush.msra.mxu0 0.0
    %1405 = vmatpush.msra.mxu0 0.0
    %1406 = vmatpush.msra.mxu0 0.0
    %1407 = vmatpush.msra.mxu0 0.0
    %1408 = vmatpush.msra.mxu0 0.0
    %1409 = vmatpush.msra.mxu0 0.0
    %1410 = vmatpush.msra.mxu0 0.0
    %1411 = vmatpush.msra.mxu0 0.0
    %1412 = vmatpush.msra.mxu0 0.0
    %1413 = vmatpush.msra.mxu0 0.0
    %1414 = vmatpush.msra.mxu0 0.0
    %1415 = vmatpush.msra.mxu0 %v1395
    %1416 = vmatpush.msra.mxu0 %v1394
    %1417 = vmatpush.msra.mxu0 %v1393
    %1418 = vmatpush.msra.mxu0 %v1392
    %1419 = vmatmul.f32.gmra.mxu0 %v1398
    %v1420 = vpop.f32.mrf.mxu0
    %v1421 = vadd.f32 %v1396, %v1420
    %1422 = vmatmul.f32.gmra.mxu0 %v1401
    %v1423 = vpop.f32.mrf.mxu0
    %v1424 = vadd.f32 %v1396, %v1423
    %1425 = vdwg.mxu0
    %v1426 = vadd.f32 %v901, %v1421
    %v1427 = vadd.f32 %v902, %v1424
    %1428 = vadd.xlane.f32.xlu0 %v1426
    %v1429 = vpop.xlane.xlu0 %1428
    %1430 = vadd.xlane.f32.xlu0 %v1427
    %v1431 = vpop.xlane.xlu0 %1430
    %v1432 = vmul.f32 %v1429, 0.03125
    %v1433 = vmul.f32 %v1431, 0.03125
    %v1434 = vsub.f32 %v1426, %v1432
    %v1435 = vsub.f32 %v1427, %v1433
    %v1436 = vmul.f32 %v1434, %v43
    %v1437 = vmul.f32 %v1435, %v43
    %v1438 = vmul.f32 %v1436, %v1436
    %v1439 = vmul.f32 %v1437, %v1437
    %1440 = vadd.xlane.f32.xlu0 %v1438
    %v1441 = vpop.xlane.xlu0 %1440
    %1442 = vadd.xlane.f32.xlu0 %v1439
    %v1443 = vpop.xlane.xlu0 %1442
    %v1444 = vmul.f32 %v1441, 0.03125
    %v1445 = vmul.f32 %v1443, 0.03125
    %v1446 = vadd.f32 %v1444, 1e-12
    %v1447 = vadd.f32 %v1445, 1e-12
    %v1448 = vrsqrt.pop %v1446
    %v1449 = vmul.f32 %v1448, %v1446
    %v1450 = vmul.f32 %v1449, %v1448
    %v1451 = vmul.f32 0.5, %v1450
    %v1452 = vsub.f32 1.5, %v1451
    %v1453 = vmul.f32 %v1448, %v1452
    %vm1454 = vweird.f32 %v1446
    %vm1455 = vweird.f32 %v1448
    %vm1456 = vmor %vm1454, %vm1455
    %v1457 = vsel %vm1456, %v1448, %v1453
    %v1458 = vrsqrt.pop %v1447
    %v1459 = vmul.f32 %v1458, %v1447
    %v1460 = vmul.f32 %v1459, %v1458
    %v1461 = vmul.f32 0.5, %v1460
    %v1462 = vsub.f32 1.5, %v1461
    %v1463 = vmul.f32 %v1458, %v1462
    %vm1464 = vweird.f32 %v1447
    %vm1465 = vweird.f32 %v1458
    %vm1466 = vmor %vm1464, %vm1465
    %v1467 = vsel %vm1466, %v1458, %v1463
    %v1468 = vmul.f32 %v1436, %v1457
    %v1469 = vmul.f32 %v1437, %v1467
    %v1470 = vperm.slane %v904, 4
    %v1471 = vmul.f32 %v1468, %v1470
    %v1472 = vmul.f32 %v1469, %v1470
    %v1473 = vperm.slane %v904, 5
    %v1474 = vadd.f32 %v1471, %v1473
    %v1475 = vadd.f32 %v1472, %v1473
    %s1476 = scalar_lea.vmem %s7, 128
    %v1477 = vld [vmem:[%s1476] sm:$0xff]
    %v1478 = vld [vmem:[%s1476 + $0x8] sm:$0xff]
    %v1479 = vld [vmem:[%s1476 + $0x10] sm:$0xff]
    %v1480 = vld [vmem:[%s1476 + $0x18] sm:$0xff]
    %v1481 = vld [vmem:[%s1476 + $0x20] sm:$0xff]
    %v1482 = vld [vmem:[%s1476 + $0x28] sm:$0xff]
    %v1483 = vld [vmem:[%s1476 + $0x30] sm:$0xff]
    %v1484 = vld [vmem:[%s1476 + $0x38] sm:$0xff]
    %v1485 = vld [vmem:[%s1476 + $0x40] sm:$0xff]
    %v1486 = vld [vmem:[%s1476 + $0x48] sm:$0xff]
    %v1487 = vld [vmem:[%s1476 + $0x50] sm:$0xff]
    %v1488 = vld [vmem:[%s1476 + $0x58] sm:$0xff]
    %v1489 = vld [vmem:[%s1476 + $0x60] sm:$0xff]
    %v1490 = vld [vmem:[%s1476 + $0x68] sm:$0xff]
    %v1491 = vld [vmem:[%s1476 + $0x70] sm:$0xff]
    %v1492 = vld [vmem:[%s1476 + $0x78] sm:$0xff]
    %v1493 = vperm.slane %v904, 6
    %1494 = vmatpush.msra.mxu0 %v1492
    %1495 = vmatpush.msra.mxu0 %v1491
    %1496 = vmatpush.msra.mxu0 %v1490
    %1497 = vmatpush.msra.mxu0 %v1489
    %1498 = vmatpush.msra.mxu0 %v1488
    %1499 = vmatpush.msra.mxu0 %v1487
    %1500 = vmatpush.msra.mxu0 %v1486
    %1501 = vmatpush.msra.mxu0 %v1485
    %1502 = vmatpush.msra.mxu0 %v1484
    %1503 = vmatpush.msra.mxu0 %v1483
    %1504 = vmatpush.msra.mxu0 %v1482
    %1505 = vmatpush.msra.mxu0 %v1481
    %1506 = vmatpush.msra.mxu0 %v1480
    %1507 = vmatpush.msra.mxu0 %v1479
    %1508 = vmatpush.msra.mxu0 %v1478
    %1509 = vmatpush.msra.mxu0 %v1477
    %1510 = vmatmul.f32.gmra.mxu0 %v1474
    %v1511 = vpop.f32.mrf.mxu0
    %v1512 = vadd.f32 %v1493, %v1511
    %1513 = vmatmul.f32.gmra.mxu0 %v1475
    %v1514 = vpop.f32.mrf.mxu0
    %v1515 = vadd.f32 %v1493, %v1514
    %1516 = vdwg.mxu0
    %v1517 = vmul.f32 %v1512, 0.5
    %v1518 = vmul.f32 %v1515, 0.5
    %v1519 = vmul.f32 %v1512, 0.70710677
    %v1520 = vmul.f32 %v1515, 0.70710677
    %v1521 = vmul.f32 %v1519, %v1519
    %v1522 = vmin.f32 16.0, %v1521
    %v1523 = vmul.f32 %v1522, 2.1237322e-06
    %v1524 = vadd.f32 %v1523, 0.00028619796
    %v1525 = vmul.f32 %v1522, %v1524
    %v1526 = vadd.f32 %v1525, 0.0036580483
    %v1527 = vmul.f32 %v1522, %v1526
    %v1528 = vadd.f32 %v1527, 0.05243302
    %v1529 = vmul.f32 %v1522, %v1528
    %v1530 = vadd.f32 %v1529, 0.18741608
    %v1531 = vmul.f32 %v1522, %v1530
    %v1532 = vadd.f32 %v1531, 1.1283791
    %v1533 = vmul.f32 %v1519, %v1532
    %v1534 = vmul.f32 %v1522, 3.8918573e-05
    %v1535 = vadd.f32 %v1534, 0.001143296
    %v1536 = vmul.f32 %v1522, %v1535
    %v1537 = vadd.f32 %v1536, 0.014752088
    %v1538 = vmul.f32 %v1522, %v1537
    %v1539 = vadd.f32 %v1538, 0.112945676
    %v1540 = vmul.f32 %v1522, %v1539
    %v1541 = vadd.f32 %v1540, 0.4994258
    %v1542 = vmul.f32 %v1522, %v1541
    %v1543 = vadd.f32 %v1542, 1.0
    %v1544 = vrcp.pop %v1543
    %v1545 = vmul.f32 %v1543, %v1544
    %v1546 = vsub.f32 1.0, %v1545
    %v1547 = vmul.f32 %v1544, %v1546
    %v1548 = vadd.f32 %v1544, %v1547
    %vm1549 = vweird.f32 %v1543
    %vm1550 = vweird.f32 %v1544
    %vm1551 = vmor %vm1549, %vm1550
    %v1552 = vsel %vm1551, %v1544, %v1548
    %v1553 = vand.u32 2147483647, %v1543
    %vm1554 = vcmp.eq.f32.partialorder %v1553, 8.507059e+37
    %v1555 = vand.u32 %v1543, 2147483648
    %v1556 = vor.u32 1.1754944e-38, %v1555
    %v1557 = vsel %vm1554, %v1556, %v1552
    %v1558 = vmul.f32 %v1533, %v1557
    %v1559 = vmin.f32 %v1558, 1.0
    %v1560 = vmax.f32 %v1559, -1.0
    %v1561 = vmul.f32 %v1520, %v1520
    %v1562 = vmin.f32 16.0, %v1561
    %v1563 = vmul.f32 %v1562, 2.1237322e-06
    %v1564 = vadd.f32 %v1563, 0.00028619796
    %v1565 = vmul.f32 %v1562, %v1564
    %v1566 = vadd.f32 %v1565, 0.0036580483
    %v1567 = vmul.f32 %v1562, %v1566
    %v1568 = vadd.f32 %v1567, 0.05243302
    %v1569 = vmul.f32 %v1562, %v1568
    %v1570 = vadd.f32 %v1569, 0.18741608
    %v1571 = vmul.f32 %v1562, %v1570
    %v1572 = vadd.f32 %v1571, 1.1283791
    %v1573 = vmul.f32 %v1520, %v1572
    %v1574 = vmul.f32 %v1562, 3.8918573e-05
    %v1575 = vadd.f32 %v1574, 0.001143296
    %v1576 = vmul.f32 %v1562, %v1575
    %v1577 = vadd.f32 %v1576, 0.014752088
    %v1578 = vmul.f32 %v1562, %v1577
    %v1579 = vadd.f32 %v1578, 0.112945676
    %v1580 = vmul.f32 %v1562, %v1579
    %v1581 = vadd.f32 %v1580, 0.4994258
    %v1582 = vmul.f32 %v1562, %v1581
    %v1583 = vadd.f32 %v1582, 1.0
    %v1584 = vrcp.pop %v1583
    %v1585 = vmul.f32 %v1583, %v1584
    %v1586 = vsub.f32 1.0, %v1585
    %v1587 = vmul.f32 %v1584, %v1586
    %v1588 = vadd.f32 %v1584, %v1587
    %vm1589 = vweird.f32 %v1583
    %vm1590 = vweird.f32 %v1584
    %vm1591 = vmor %vm1589, %vm1590
    %v1592 = vsel %vm1591, %v1584, %v1588
    %v1593 = vand.u32 2147483647, %v1583
    %vm1594 = vcmp.eq.f32.partialorder %v1593, 8.507059e+37
    %v1595 = vand.u32 %v1583, 2147483648
    %v1596 = vor.u32 1.1754944e-38, %v1595
    %v1597 = vsel %vm1594, %v1596, %v1592
    %v1598 = vmul.f32 %v1573, %v1597
    %v1599 = vmin.f32 %v1598, 1.0
    %v1600 = vmax.f32 %v1599, -1.0
    %v1601 = vadd.f32 %v1560, 1.0
    %v1602 = vadd.f32 %v1600, 1.0
    %v1603 = vmul.f32 %v1517, %v1601
    %v1604 = vmul.f32 %v1518, %v1602
    %s1605 = scalar_lea.vmem %s8, 64
    %v1606 = vld [vmem:[%s1605] sm:$0xff]
    %v1607 = vld [vmem:[%s1605 + $0x8] sm:$0xff]
    %v1608 = vld [vmem:[%s1605 + $0x10] sm:$0xff]
    %v1609 = vld [vmem:[%s1605 + $0x18] sm:$0xff]
    %v1610 = vld [vmem:[%s1605 + $0x20] sm:$0xff]
    %v1611 = vld [vmem:[%s1605 + $0x28] sm:$0xff]
    %v1612 = vld [vmem:[%s1605 + $0x30] sm:$0xff]
    %v1613 = vld [vmem:[%s1605 + $0x38] sm:$0xff]
    %v1614 = vperm.slane %v904, 7
    %v1616 = vsel %vm823, %v1603, 0
    %v1619 = vsel %vm823, %v1604, 0
    %1621 = vmatpush.msra.mxu0 0.0
    %1622 = vmatpush.msra.mxu0 0.0
    %1623 = vmatpush.msra.mxu0 0.0
    %1624 = vmatpush.msra.mxu0 0.0
    %1625 = vmatpush.msra.mxu0 0.0
    %1626 = vmatpush.msra.mxu0 0.0
    %1627 = vmatpush.msra.mxu0 0.0
    %1628 = vmatpush.msra.mxu0 0.0
    %1629 = vmatpush.msra.mxu0 %v1613
    %1630 = vmatpush.msra.mxu0 %v1612
    %1631 = vmatpush.msra.mxu0 %v1611
    %1632 = vmatpush.msra.mxu0 %v1610
    %1633 = vmatpush.msra.mxu0 %v1609
    %1634 = vmatpush.msra.mxu0 %v1608
    %1635 = vmatpush.msra.mxu0 %v1607
    %1636 = vmatpush.msra.mxu0 %v1606
    %1637 = vmatmul.f32.gmra.mxu0 %v1616
    %v1638 = vpop.f32.mrf.mxu0
    %v1639 = vadd.f32 %v1614, %v1638
    %1640 = vmatmul.f32.gmra.mxu0 %v1619
    %v1641 = vpop.f32.mrf.mxu0
    %v1642 = vadd.f32 %v1614, %v1641
    %1643 = vdwg.mxu0
    %v1644 = vadd.f32 %v1474, %v1639
    %v1645 = vadd.f32 %v1475, %v1642
    %1646 = vadd.xlane.f32.xlu0 %v1644
    %v1647 = vpop.xlane.xlu0 %1646
    %1648 = vadd.xlane.f32.xlu0 %v1645
    %v1649 = vpop.xlane.xlu0 %1648
    %v1650 = vmul.f32 %v1647, 0.03125
    %v1651 = vmul.f32 %v1649, 0.03125
    %v1652 = vsub.f32 %v1644, %v1650
    %v1653 = vsub.f32 %v1645, %v1651
    %v1654 = vmul.f32 %v1652, %v43
    %v1655 = vmul.f32 %v1653, %v43
    %v1656 = vmul.f32 %v1654, %v1654
    %v1657 = vmul.f32 %v1655, %v1655
    %1658 = vadd.xlane.f32.xlu0 %v1656
    %v1659 = vpop.xlane.xlu0 %1658
    %1660 = vadd.xlane.f32.xlu0 %v1657
    %v1661 = vpop.xlane.xlu0 %1660
    %v1662 = vmul.f32 %v1659, 0.03125
    %v1663 = vmul.f32 %v1661, 0.03125
    %v1664 = vadd.f32 %v1662, 1e-12
    %v1665 = vadd.f32 %v1663, 1e-12
    %v1666 = vrsqrt.pop %v1664
    %v1667 = vmul.f32 %v1666, %v1664
    %v1668 = vmul.f32 %v1667, %v1666
    %v1669 = vmul.f32 0.5, %v1668
    %v1670 = vsub.f32 1.5, %v1669
    %v1671 = vmul.f32 %v1666, %v1670
    %vm1672 = vweird.f32 %v1664
    %vm1673 = vweird.f32 %v1666
    %vm1674 = vmor %vm1672, %vm1673
    %v1675 = vsel %vm1674, %v1666, %v1671
    %v1676 = vrsqrt.pop %v1665
    %v1677 = vmul.f32 %v1676, %v1665
    %v1678 = vmul.f32 %v1677, %v1676
    %v1679 = vmul.f32 0.5, %v1678
    %v1680 = vsub.f32 1.5, %v1679
    %v1681 = vmul.f32 %v1676, %v1680
    %vm1682 = vweird.f32 %v1665
    %vm1683 = vweird.f32 %v1676
    %vm1684 = vmor %vm1682, %vm1683
    %v1685 = vsel %vm1684, %v1676, %v1681
    %v1686 = vmul.f32 %v1654, %v1675
    %v1687 = vmul.f32 %v1655, %v1685
    %v1688 = vperm.slane %v905, 0
    %v1689 = vmul.f32 %v1686, %v1688
    %v1690 = vmul.f32 %v1687, %v1688
    %v1691 = vperm.slane %v905, 1
    %v1692 = vadd.f32 %v1689, %v1691
    %v1693 = vadd.f32 %v1690, %v1691
    %v1694 = vld [vmem:[%s10] sm:$0xff]
    %v1695 = vld [vmem:[%s10 + $0x8] sm:$0xff]
    %v1696 = vld [vmem:[%s10 + $0x10] sm:$0xff]
    %v1697 = vld [vmem:[%s10 + $0x18] sm:$0xff]
    %v1698 = vld [vmem:[%s10 + $0x20] sm:$0xff]
    %v1699 = vld [vmem:[%s10 + $0x28] sm:$0xff]
    %v1700 = vld [vmem:[%s10 + $0x30] sm:$0xff]
    %v1701 = vld [vmem:[%s10 + $0x38] sm:$0xff]
    %v1702 = vld [vmem:[%s10 + $0x40] sm:$0xff]
    %v1703 = vld [vmem:[%s10 + $0x48] sm:$0xff]
    %v1704 = vld [vmem:[%s10 + $0x50] sm:$0xff]
    %v1705 = vld [vmem:[%s10 + $0x58] sm:$0xff]
    %v1706 = vld [vmem:[%s10 + $0x60] sm:$0xff]
    %v1707 = vld [vmem:[%s10 + $0x68] sm:$0xff]
    %v1708 = vld [vmem:[%s10 + $0x70] sm:$0xff]
    %v1709 = vld [vmem:[%s10 + $0x78] sm:$0xff]
    %v1710 = vperm.slane %v65, 2
    %v1713 = vrot.slane %v1692, 7
    %v1714 = vrot.slane %v1693, 6
    %vm1715 = vcmask 1041409
    %v1716 = vsel %vm1715, %v1714, %v1713
    %1718 = vmatpush.msra.mxu0 %v1709
    %1719 = vmatpush.msra.mxu0 %v1708
    %1720 = vmatpush.msra.mxu0 %v1707
    %1721 = vmatpush.msra.mxu0 %v1706
    %1722 = vmatpush.msra.mxu0 %v1705
    %1723 = vmatpush.msra.mxu0 %v1704
    %1724 = vmatpush.msra.mxu0 %v1703
    %1725 = vmatpush.msra.mxu0 %v1702
    %1726 = vmatpush.msra.mxu0 %v1701
    %1727 = vmatpush.msra.mxu0 %v1700
    %1728 = vmatpush.msra.mxu0 %v1699
    %1729 = vmatpush.msra.mxu0 %v1698
    %1730 = vmatpush.msra.mxu0 %v1697
    %1731 = vmatpush.msra.mxu0 %v1696
    %1732 = vmatpush.msra.mxu0 %v1695
    %1733 = vmatpush.msra.mxu0 %v1694
    %1734 = vmatmul.f32.gmra.mxu0 %v1716
    %v1735 = vpop.f32.mrf.mxu0
    %v1736 = vadd.f32 %v1710, %v1735
    %1737 = vdwg.mxu0
    %1738 = vst [vmem:[#allocation2] sm:$0x3] %v1736
    // Predicated region
    $region46: #{bert_forward.1} parent=1 // pred_check
      _
    $region47: #{bert_forward.1} parent=1 // pred_check_branch
      %1740 = sbr.rel (0) target = $region49
    $region48: #{bert_forward.1} parent=1 // pred_region
      %1742 = vsyncadd [#allocation3], 0
      %s1744 = sshll.u32 [#allocation2], 4
      %s1745 = int_to_ptr.vmem [resolvable:$true] %s1744
      %s1746 = sshll.u32 %s11, 4
      %s1747 = int_to_ptr.hbm [resolvable:$true] %s1746
      %1749 = dma.vmem_to_hbm [thread:$0]  %s1745, 32, %s1747, [#allocation3]
    $region49: #{bert_forward.1} parent=1 // pred_fallthru
      _
    // Predicated region
    $region50: #{bert_forward.1} parent=1 // pred_check
      _
    $region51: #{bert_forward.1} parent=1 // pred_check_branch
      %1751 = sbr.rel (0) target = $region53
    $region52: #{bert_forward.1} parent=1 // pred_region
      %1753 = dma.done [#allocation3], 32
    $region53: #{bert_forward.1} parent=1 // pred_fallthru
      _
    %1754 = vsyncpa [#allocation3], 1

</llo_original>
